<compile_context>
chip_gen: v7x
topology: tpu7x:2x2x1
jax: 0.10.0
libtpu: 0.0.40
codegen_flags: <defaults>
</compile_context>

<pallas_src>
import functools
import math

import jax
import jax.numpy as jnp
from jax import lax
from jax.experimental import pallas as pl
from jax.experimental.pallas import tpu as pltpu


# ----------------------------------------------------------------------------
# Fused whole-stack kernel (grid = (num_layers,))
# ----------------------------------------------------------------------------
def _layer_norm(t, g, b, eps):
    mu = jnp.mean(t, axis=-1, keepdims=True)
    var = jnp.mean((t - mu) ** 2, axis=-1, keepdims=True)
    return (t - mu) * lax.rsqrt(var + eps) * g + b


def _encoder_stack_kernel(
    x_ref, mask_ref,
    wqkv_ref, bqkv_ref, wo_ref, bo_ref,
    g1_ref, be1_ref,
    w1_ref, b1_ref, w2_ref, b2_ref,
    g2_ref, be2_ref,
    y_ref, attn_ref,
    x_scr,
    *, batch, seq, num_heads, eps,
):
    layer = pl.program_id(0)

    # Layer 0: load the input activation into the resident carry buffer.
    @pl.when(layer == 0)
    def _():
        x_scr[...] = x_ref[...].astype(jnp.float32)

    x = x_scr[...]                                   # (B*S, D) f32, carried layer->layer
    bs, d = x.shape
    b_, s_, h_ = batch, seq, num_heads
    dh = d // h_
    scale = 1.0 / math.sqrt(dh)
    mdt = wqkv_ref.dtype                             # matmul operand dtype (bf16 / f32)

    # Fused QKV projection: one MXU pass instead of three (f32 accumulate).
    qkv = jnp.dot(x.astype(mdt), wqkv_ref[0],
                  preferred_element_type=jnp.float32) + bqkv_ref[0]      # (BS, 3D)
    q = qkv[:, :d].astype(mdt)
    k = qkv[:, d:2 * d].astype(mdt)
    v = qkv[:, 2 * d:].astype(mdt)

    mask = mask_ref[...]                             # (S, S) additive mask

    # Scores for every (batch, head) stacked along sublanes -> one batched softmax,
    # one store of the attention weights per layer.
    score_tiles = []
    for b in range(b_):
        for h in range(h_):
            qh = q[b * s_:(b + 1) * s_, h * dh:(h + 1) * dh]             # (S, dh)
            kh = k[b * s_:(b + 1) * s_, h * dh:(h + 1) * dh]
            s = lax.dot_general(qh, kh, (((1,), (1,)), ((), ())),        # qh @ kh^T
                                preferred_element_type=jnp.float32)
            score_tiles.append(s * scale + mask)
    scores = jnp.concatenate(score_tiles, axis=0)                        # (B*H*S, S)

    scores = scores - jnp.max(scores, axis=-1, keepdims=True)
    p = jnp.exp(scores)
    p = p * pl.reciprocal(jnp.sum(p, axis=-1, keepdims=True), approx=True)
    attn_ref[0] = p.astype(attn_ref.dtype)

    # P @ V per (batch, head); contexts stay in vregs (no VMEM scratch round trip).
    pm = p.astype(mdt)
    ctx_rows = []
    for b in range(b_):
        head_ctx = []
        for h in range(h_):
            r0 = (b * h_ + h) * s_
            pbh = pm[r0:r0 + s_, :]                                      # (S, S)
            vbh = v[b * s_:(b + 1) * s_, h * dh:(h + 1) * dh]            # (S, dh)
            head_ctx.append(jnp.dot(pbh, vbh,
                                    preferred_element_type=jnp.float32))
        ctx_rows.append(jnp.concatenate(head_ctx, axis=-1))              # (S, D)
    ctx = jnp.concatenate(ctx_rows, axis=0)                              # (BS, D)

    # Output projection + residual + LayerNorm1.
    attn_out = jnp.dot(ctx.astype(mdt), wo_ref[0],
                       preferred_element_type=jnp.float32) + bo_ref[0]
    y1 = _layer_norm(x + attn_out, g1_ref[0], be1_ref[0], eps)

    # FFN + residual + LayerNorm2.
    h1 = jnp.maximum(
        jnp.dot(y1.astype(mdt), w1_ref[0],
                preferred_element_type=jnp.float32) + b1_ref[0], 0.0)
    f = jnp.dot(h1.astype(mdt), w2_ref[0],
                preferred_element_type=jnp.float32) + b2_ref[0]
    y2 = _layer_norm(y1 + f, g2_ref[0], be2_ref[0], eps)

    y_ref[0] = y2.astype(y_ref.dtype)
    x_scr[...] = y2                                  # carry activation to next layer


# ----------------------------------------------------------------------------
# One-time parameter preparation (hoisted out of the forward path)
# ----------------------------------------------------------------------------
def stack_layer_params(layers_params, matmul_dtype=jnp.bfloat16):
    """Transpose torch-layout weights to (in, out), fuse Wq|Wk|Wv, cast matmul
    weights to `matmul_dtype`, and stack all layers along a leading L axis."""
    def stk(fn):
        return jnp.stack([fn(p) for p in layers_params])
    mm = lambda a: a.astype(matmul_dtype)
    row = lambda a: a.reshape(1, -1).astype(jnp.float32)
    return dict(
        wqkv=stk(lambda p: mm(jnp.concatenate([p["wq"].T, p["wk"].T, p["wv"].T], 1))),
        bqkv=stk(lambda p: row(jnp.concatenate([p["bq"], p["bk"], p["bv"]]))),
        wo=stk(lambda p: mm(p["wo"].T)), bo=stk(lambda p: row(p["bo"])),
        g1=stk(lambda p: row(p["g1"])), be1=stk(lambda p: row(p["be1"])),
        w1=stk(lambda p: mm(p["w1"].T)), b1=stk(lambda p: row(p["b1"])),
        w2=stk(lambda p: mm(p["w2"].T)), b2=stk(lambda p: row(p["b2"])),
        g2=stk(lambda p: row(p["g2"])), be2=stk(lambda p: row(p["be2"])),
    )


# ----------------------------------------------------------------------------
# Forward: the whole encoder stack in a single pallas_call
# ----------------------------------------------------------------------------
def transformer_encoder(x, stacked, mask=None, *, num_heads, eps=1e-5):
    """Mirrors TransformerEncoder.forward: returns (layer_outputs, attn_weights)
    as lists of length num_layers (per-head attention probabilities)."""
    B, S, D = x.shape
    H = num_heads
    L, _, FF = stacked["w1"].shape
    BS = B * S
    mask_arr = (jnp.zeros((S, S), jnp.float32) if mask is None
                else mask.astype(jnp.float32))

    operands = (x.reshape(BS, D), mask_arr,
                stacked["wqkv"], stacked["bqkv"], stacked["wo"], stacked["bo"],
                stacked["g1"], stacked["be1"],
                stacked["w1"], stacked["b1"], stacked["w2"], stacked["b2"],
                stacked["g2"], stacked["be2"])

    def resident(shape):
        return pl.BlockSpec(shape, lambda l: (0,) * len(shape))

    def per_layer(shape):
        blk = (1,) + tuple(shape[1:])
        return pl.BlockSpec(blk, lambda l: (l,) + (0,) * (len(shape) - 1))

    in_specs = [resident((BS, D)), resident((S, S))]
    in_specs += [per_layer(a.shape) for a in operands[2:]]
    out_specs = [
        pl.BlockSpec((1, BS, D), lambda l: (l, 0, 0)),
        pl.BlockSpec((1, B * H * S, S), lambda l: (l, 0, 0)),
    ]

    # Advisory cost estimate for the whole stack.
    dh = D // H
    flops = L * (2 * BS * D * 3 * D + 4 * B * H * S * S * dh
                 + 2 * BS * D * D + 4 * BS * D * FF)
    transcendentals = L * (B * H * S * S + 2 * BS)
    bytes_accessed = (sum(int(a.size) * a.dtype.itemsize for a in operands)
                      + 4 * L * (BS * D + B * H * S * S))

    kernel = functools.partial(_encoder_stack_kernel,
                               batch=B, seq=S, num_heads=H, eps=eps)

    y_all, attn_all = pl.pallas_call(
        kernel,
        out_shape=(jax.ShapeDtypeStruct((L, BS, D), x.dtype),
                   jax.ShapeDtypeStruct((L, B * H * S, S), jnp.float32)),
        grid_spec=pltpu.PrefetchScalarGridSpec(
            num_scalar_prefetch=0,
            grid=(L,),                                   # sequential over layers
            in_specs=in_specs,
            out_specs=out_specs,
            scratch_shapes=[pltpu.VMEM((BS, D), jnp.float32)],   # activation carry
        ),
        compiler_params=pltpu.CompilerParams(
            # Layer axis has a data dependence (activation carry) -> arbitrary.
            # TODO(synk): on v7x (2 TensorCores) a leading "parallel" batch-block
            # axis (grid=(2, L)) would use both cores; omitted since v5e/v6e have a
            # single TC and B*S=16 fits a single MXU pass.
            dimension_semantics=("arbitrary",),
        ),
        cost_estimate=pl.CostEstimate(flops=flops,
                                      transcendentals=transcendentals,
                                      bytes_accessed=bytes_accessed),
    )(*operands)

    layer_outputs = [y_all[l].reshape(B, S, D) for l in range(L)]
    attn_weights = [attn_all[l].reshape(B, H, S, S) for l in range(L)]
    return layer_outputs, attn_weights


# ----------------------------------------------------------------------------
# Pure-JAX f32 reference for correctness
# ----------------------------------------------------------------------------
def _reference_layer(x, mask, p, *, num_heads, eps=1e-5):
    B, S, D = x.shape
    dh = D // num_heads
    scale = 1.0 / math.sqrt(dh)
    q = x @ p["wq"].T + p["bq"]
    k = x @ p["wk"].T + p["bk"]
    v = x @ p["wv"].T + p["bv"]
    qh = q.reshape(B, S, num_heads, dh).transpose(0, 2, 1, 3)
    kh = k.reshape(B, S, num_heads, dh).transpose(0, 2, 1, 3)
    vh = v.reshape(B, S, num_heads, dh).transpose(0, 2, 1, 3)
    s = jnp.einsum("bhqd,bhkd->bhqk", qh, kh) * scale + mask
    s = s - s.max(-1, keepdims=True)
    attn = jnp.exp(s)
    attn = attn / attn.sum(-1, keepdims=True)
    ctx = jnp.einsum("bhqk,bhkd->bhqd", attn, vh)
    ctx = ctx.transpose(0, 2, 1, 3).reshape(B, S, D)
    ao = ctx @ p["wo"].T + p["bo"]

    def ln(t, g, b):
        mu = t.mean(-1, keepdims=True)
        var = ((t - mu) ** 2).mean(-1, keepdims=True)
        return (t - mu) * jax.lax.rsqrt(var + eps) * g + b

    y1 = ln(x + ao, p["g1"], p["be1"])
    h1 = jnp.maximum(y1 @ p["w1"].T + p["b1"], 0.0)
    y2 = ln(y1 + h1 @ p["w2"].T + p["b2"], p["g2"], p["be2"])
    return y2, attn


def _reference(x, layers_params, mask, *, num_heads):
    outs, ws = [], []
    for p in layers_params:
        x, w = _reference_layer(x, mask, p, num_heads=num_heads)
        outs.append(x)
        ws.append(w)
    return outs, ws


# ----------------------------------------------------------------------------
if __name__ == "__main__":
    # Small shapes implied by the forward: batch=2, seq=8, hidden=32, heads=4, ff=64.
    B, S, D, H, FF, L = 2, 8, 32, 4, 64, 2

    key = jax.random.PRNGKey(0)
    key, kx = jax.random.split(key)
    x = jax.random.normal(kx, (B, S, D), dtype=jnp.float32)

    layers_params = []
    for _ in range(L):
        key, *ks = jax.random.split(key, 15)
        layers_params.append(dict(
            wq=jax.random.normal(ks[0], (D, D), jnp.float32) * 0.05,
            bq=jax.random.normal(ks[1], (D,), jnp.float32) * 0.01,
            wk=jax.random.normal(ks[2], (D, D), jnp.float32) * 0.05,
            bk=jax.random.normal(ks[3], (D,), jnp.float32) * 0.01,
            wv=jax.random.normal(ks[4], (D, D), jnp.float32) * 0.05,
            bv=jax.random.normal(ks[5], (D,), jnp.float32) * 0.01,
            wo=jax.random.normal(ks[6], (D, D), jnp.float32) * 0.05,
            bo=jax.random.normal(ks[7], (D,), jnp.float32) * 0.01,
            g1=1.0 + 0.1 * jax.random.normal(ks[8], (D,), jnp.float32),
            be1=0.1 * jax.random.normal(ks[9], (D,), jnp.float32),
            w1=jax.random.normal(ks[10], (FF, D), jnp.float32) * 0.05,
            b1=jax.random.normal(ks[11], (FF,), jnp.float32) * 0.01,
            w2=jax.random.normal(ks[12], (D, FF), jnp.float32) * 0.05,
            b2=jax.random.normal(ks[13], (D,), jnp.float32) * 0.01,
            g2=1.0 + 0.1 * jax.random.normal(key, (D,), jnp.float32),
            be2=jnp.zeros((D,), jnp.float32),
        ))

    # One-time parameter prep (bf16 matmul operands; f32 biases / LN params).
    stacked = stack_layer_params(layers_params, matmul_dtype=jnp.bfloat16)

    # TODO(synk): dropout layers of the (unspecified) encoder_layer are omitted
    # (eval mode); per-head attention probs are returned (PyTorch MHA averages heads
    # by default).
    layer_outputs, attn_weights = transformer_encoder(
        x, stacked, mask=None, num_heads=H)
    for a in layer_outputs + attn_weights:
        jax.block_until_ready(a)

    ref_outs, ref_ws = _reference(x, layers_params, jnp.zeros((S, S), jnp.float32),
                                  num_heads=H)
    # bf16 matmul operands + approx reciprocal -> loosened tolerance vs f32 reference.
    TOL = 3e-2
    for got, want in zip(layer_outputs, ref_outs):
        assert got.shape == (B, S, D)
        assert jnp.allclose(got, want, atol=TOL, rtol=TOL)
    for got, want in zip(attn_weights, ref_ws):
        assert got.shape == (B, H, S, S)
        assert jnp.allclose(got, want, atol=TOL, rtol=TOL)

    print("KERNEL_OK")
</pallas_src>

<mosaic_0001>
module attributes {stable_mosaic.version = 11 : i64} {
  func.func @_encoder_stack_kernel(%arg0: i32, %arg1: memref<16x32xf32, #tpu.memory_space<vmem>>, %arg2: memref<8x8xf32, #tpu.memory_space<vmem>>, %arg3: memref<1x32x96xbf16, #tpu.memory_space<vmem>>, %arg4: memref<1x1x96xf32, #tpu.memory_space<vmem>>, %arg5: memref<1x32x32xbf16, #tpu.memory_space<vmem>>, %arg6: memref<1x1x32xf32, #tpu.memory_space<vmem>>, %arg7: memref<1x1x32xf32, #tpu.memory_space<vmem>>, %arg8: memref<1x1x32xf32, #tpu.memory_space<vmem>>, %arg9: memref<1x32x64xbf16, #tpu.memory_space<vmem>>, %arg10: memref<1x1x64xf32, #tpu.memory_space<vmem>>, %arg11: memref<1x64x32xbf16, #tpu.memory_space<vmem>>, %arg12: memref<1x1x32xf32, #tpu.memory_space<vmem>>, %arg13: memref<1x1x32xf32, #tpu.memory_space<vmem>>, %arg14: memref<1x1x32xf32, #tpu.memory_space<vmem>>, %arg15: memref<1x16x32xf32, #tpu.memory_space<vmem>>, %arg16: memref<1x64x8xf32, #tpu.memory_space<vmem>>, %arg17: memref<16x32xf32, #tpu.memory_space<vmem>>) attributes {dimension_semantics = [#tpu.dimension_semantics<arbitrary>], iteration_bounds = array<i64: 2>, scalar_prefetch = 0 : i64, scratch_operands = 1 : i64, tpu.core_type = #tpu.core_type<tc>, window_params = [{pipeline_mode = #tpu.pipeline_mode<synchronous>, transform_indices = @transform_0, window_bounds = array<i64: 16, 32>}, {pipeline_mode = #tpu.pipeline_mode<synchronous>, transform_indices = @transform_1, window_bounds = array<i64: 8, 8>}, {transform_indices = @transform_2, window_bounds = array<i64: 1, 32, 96>}, {transform_indices = @transform_3, window_bounds = array<i64: 1, 1, 96>}, {transform_indices = @transform_4, window_bounds = array<i64: 1, 32, 32>}, {transform_indices = @transform_5, window_bounds = array<i64: 1, 1, 32>}, {transform_indices = @transform_6, window_bounds = array<i64: 1, 1, 32>}, {transform_indices = @transform_7, window_bounds = array<i64: 1, 1, 32>}, {transform_indices = @transform_8, window_bounds = array<i64: 1, 32, 64>}, {transform_indices = @transform_9, window_bounds = array<i64: 1, 1, 64>}, {transform_indices = @transform_10, window_bounds = array<i64: 1, 64, 32>}, {transform_indices = @transform_11, window_bounds = array<i64: 1, 1, 32>}, {transform_indices = @transform_12, window_bounds = array<i64: 1, 1, 32>}, {transform_indices = @transform_13, window_bounds = array<i64: 1, 1, 32>}, {transform_indices = @transform_14, window_bounds = array<i64: 1, 16, 32>}, {transform_indices = @transform_15, window_bounds = array<i64: 1, 64, 8>}]} {
    %c0_i32 = arith.constant 0 : i32
    %0 = arith.cmpi eq, %arg0, %c0_i32 : i32
    %1 = arith.extui %0 : i1 to i32
    %c0_i32_0 = arith.constant 0 : i32
    %2 = arith.cmpi ne, %1, %c0_i32_0 : i32
    scf.if %2 {
      %c0_88 = arith.constant 0 : index
      %c0_89 = arith.constant 0 : index
      %193 = vector.load %arg1[%c0_88, %c0_89] : memref<16x32xf32, #tpu.memory_space<vmem>>, vector<16x32xf32>
      %c0_90 = arith.constant 0 : index
      %c0_91 = arith.constant 0 : index
      %194 = vector.load %arg17[%c0_90, %c0_91] : memref<16x32xf32, #tpu.memory_space<vmem>>, vector<16x32xf32>
      tpu.vector_store %arg17[%c0_90, %c0_91], %193 {strides = array<i32>} : memref<16x32xf32, #tpu.memory_space<vmem>>, vector<16x32xf32>,
    } else {
    }
    %c0 = arith.constant 0 : index
    %c0_1 = arith.constant 0 : index
    %3 = vector.load %arg17[%c0, %c0_1] : memref<16x32xf32, #tpu.memory_space<vmem>>, vector<16x32xf32>
    %4 = arith.truncf %3 : vector<16x32xf32> to vector<16x32xbf16>
    %c0_2 = arith.constant 0 : index
    %c0_3 = arith.constant 0 : index
    %c0_4 = arith.constant 0 : index
    %5 = vector.load %arg3[%c0_2, %c0_3, %c0_4] : memref<1x32x96xbf16, #tpu.memory_space<vmem>>, vector<1x32x96xbf16>
    %6 = vector.shape_cast %5 : vector<1x32x96xbf16> to vector<32x96xbf16>
    %cst = arith.constant dense<0.000000e+00> : vector<16x96xf32>
    %7 = tpu.matmul %4, %6, %cst {dimension_numbers = #tpu.dot_dimension_numbers<[1], [0], [0], [1], [0, 0, 1, 1], [], []>} : vector<16x32xbf16>, vector<32x96xbf16>, vector<16x96xf32> -> vector<16x96xf32>
    %c0_5 = arith.constant 0 : index
    %c0_6 = arith.constant 0 : index
    %c0_7 = arith.constant 0 : index
    %8 = vector.load %arg4[%c0_5, %c0_6, %c0_7] : memref<1x1x96xf32, #tpu.memory_space<vmem>>, vector<1x1x96xf32>
    %9 = vector.shape_cast %8 : vector<1x1x96xf32> to vector<1x96xf32>
    %10 = vector.broadcast %9 : vector<1x96xf32> to vector<16x96xf32>
    %11 = arith.addf %7, %10 : vector<16x96xf32>
    %12 = vector.extract_strided_slice %11 {offsets = [0, 0], sizes = [16, 32], strides = [1, 1]} : vector<16x96xf32> to vector<16x32xf32>
    %13 = arith.truncf %12 : vector<16x32xf32> to vector<16x32xbf16>
    %14 = vector.extract_strided_slice %11 {offsets = [0, 32], sizes = [16, 32], strides = [1, 1]} : vector<16x96xf32> to vector<16x32xf32>
    %15 = arith.truncf %14 : vector<16x32xf32> to vector<16x32xbf16>
    %16 = vector.extract_strided_slice %11 {offsets = [0, 64], sizes = [16, 32], strides = [1, 1]} : vector<16x96xf32> to vector<16x32xf32>
    %17 = arith.truncf %16 : vector<16x32xf32> to vector<16x32xbf16>
    %c0_8 = arith.constant 0 : index
    %c0_9 = arith.constant 0 : index
    %18 = vector.load %arg2[%c0_8, %c0_9] : memref<8x8xf32, #tpu.memory_space<vmem>>, vector<8x8xf32>
    %19 = vector.extract_strided_slice %13 {offsets = [0, 0], sizes = [8, 8], strides = [1, 1]} : vector<16x32xbf16> to vector<8x8xbf16>
    %20 = vector.extract_strided_slice %15 {offsets = [0, 0], sizes = [8, 8], strides = [1, 1]} : vector<16x32xbf16> to vector<8x8xbf16>
    %cst_10 = arith.constant dense<0.000000e+00> : vector<8x8xf32>
    %21 = tpu.matmul %19, %20, %cst_10 {dimension_numbers = #tpu.dot_dimension_numbers<[1], [1], [0], [0], [0, 0, 1, 0], [], []>} : vector<8x8xbf16>, vector<8x8xbf16>, vector<8x8xf32> -> vector<8x8xf32>
    %cst_11 = arith.constant 0.353553385 : f32
    %22 = vector.broadcast %cst_11 : f32 to vector<8x8xf32>
    %23 = arith.mulf %21, %22 : vector<8x8xf32>
    %24 = arith.addf %23, %18 : vector<8x8xf32>
    %25 = vector.extract_strided_slice %13 {offsets = [0, 8], sizes = [8, 8], strides = [1, 1]} : vector<16x32xbf16> to vector<8x8xbf16>
    %26 = vector.extract_strided_slice %15 {offsets = [0, 8], sizes = [8, 8], strides = [1, 1]} : vector<16x32xbf16> to vector<8x8xbf16>
    %cst_12 = arith.constant dense<0.000000e+00> : vector<8x8xf32>
    %27 = tpu.matmul %25, %26, %cst_12 {dimension_numbers = #tpu.dot_dimension_numbers<[1], [1], [0], [0], [0, 0, 1, 0], [], []>} : vector<8x8xbf16>, vector<8x8xbf16>, vector<8x8xf32> -> vector<8x8xf32>
    %cst_13 = arith.constant 0.353553385 : f32
    %28 = vector.broadcast %cst_13 : f32 to vector<8x8xf32>
    %29 = arith.mulf %27, %28 : vector<8x8xf32>
    %30 = arith.addf %29, %18 : vector<8x8xf32>
    %31 = vector.extract_strided_slice %13 {offsets = [0, 16], sizes = [8, 8], strides = [1, 1]} : vector<16x32xbf16> to vector<8x8xbf16>
    %32 = vector.extract_strided_slice %15 {offsets = [0, 16], sizes = [8, 8], strides = [1, 1]} : vector<16x32xbf16> to vector<8x8xbf16>
    %cst_14 = arith.constant dense<0.000000e+00> : vector<8x8xf32>
    %33 = tpu.matmul %31, %32, %cst_14 {dimension_numbers = #tpu.dot_dimension_numbers<[1], [1], [0], [0], [0, 0, 1, 0], [], []>} : vector<8x8xbf16>, vector<8x8xbf16>, vector<8x8xf32> -> vector<8x8xf32>
    %cst_15 = arith.constant 0.353553385 : f32
    %34 = vector.broadcast %cst_15 : f32 to vector<8x8xf32>
    %35 = arith.mulf %33, %34 : vector<8x8xf32>
    %36 = arith.addf %35, %18 : vector<8x8xf32>
    %37 = vector.extract_strided_slice %13 {offsets = [0, 24], sizes = [8, 8], strides = [1, 1]} : vector<16x32xbf16> to vector<8x8xbf16>
    %38 = vector.extract_strided_slice %15 {offsets = [0, 24], sizes = [8, 8], strides = [1, 1]} : vector<16x32xbf16> to vector<8x8xbf16>
    %cst_16 = arith.constant dense<0.000000e+00> : vector<8x8xf32>
    %39 = tpu.matmul %37, %38, %cst_16 {dimension_numbers = #tpu.dot_dimension_numbers<[1], [1], [0], [0], [0, 0, 1, 0], [], []>} : vector<8x8xbf16>, vector<8x8xbf16>, vector<8x8xf32> -> vector<8x8xf32>
    %cst_17 = arith.constant 0.353553385 : f32
    %40 = vector.broadcast %cst_17 : f32 to vector<8x8xf32>
    %41 = arith.mulf %39, %40 : vector<8x8xf32>
    %42 = arith.addf %41, %18 : vector<8x8xf32>
    %43 = vector.extract_strided_slice %13 {offsets = [8, 0], sizes = [8, 8], strides = [1, 1]} : vector<16x32xbf16> to vector<8x8xbf16>
    %44 = vector.extract_strided_slice %15 {offsets = [8, 0], sizes = [8, 8], strides = [1, 1]} : vector<16x32xbf16> to vector<8x8xbf16>
    %cst_18 = arith.constant dense<0.000000e+00> : vector<8x8xf32>
    %45 = tpu.matmul %43, %44, %cst_18 {dimension_numbers = #tpu.dot_dimension_numbers<[1], [1], [0], [0], [0, 0, 1, 0], [], []>} : vector<8x8xbf16>, vector<8x8xbf16>, vector<8x8xf32> -> vector<8x8xf32>
    %cst_19 = arith.constant 0.353553385 : f32
    %46 = vector.broadcast %cst_19 : f32 to vector<8x8xf32>
    %47 = arith.mulf %45, %46 : vector<8x8xf32>
    %48 = arith.addf %47, %18 : vector<8x8xf32>
    %49 = vector.extract_strided_slice %13 {offsets = [8, 8], sizes = [8, 8], strides = [1, 1]} : vector<16x32xbf16> to vector<8x8xbf16>
    %50 = vector.extract_strided_slice %15 {offsets = [8, 8], sizes = [8, 8], strides = [1, 1]} : vector<16x32xbf16> to vector<8x8xbf16>
    %cst_20 = arith.constant dense<0.000000e+00> : vector<8x8xf32>
    %51 = tpu.matmul %49, %50, %cst_20 {dimension_numbers = #tpu.dot_dimension_numbers<[1], [1], [0], [0], [0, 0, 1, 0], [], []>} : vector<8x8xbf16>, vector<8x8xbf16>, vector<8x8xf32> -> vector<8x8xf32>
    %cst_21 = arith.constant 0.353553385 : f32
    %52 = vector.broadcast %cst_21 : f32 to vector<8x8xf32>
    %53 = arith.mulf %51, %52 : vector<8x8xf32>
    %54 = arith.addf %53, %18 : vector<8x8xf32>
    %55 = vector.extract_strided_slice %13 {offsets = [8, 16], sizes = [8, 8], strides = [1, 1]} : vector<16x32xbf16> to vector<8x8xbf16>
    %56 = vector.extract_strided_slice %15 {offsets = [8, 16], sizes = [8, 8], strides = [1, 1]} : vector<16x32xbf16> to vector<8x8xbf16>
    %cst_22 = arith.constant dense<0.000000e+00> : vector<8x8xf32>
    %57 = tpu.matmul %55, %56, %cst_22 {dimension_numbers = #tpu.dot_dimension_numbers<[1], [1], [0], [0], [0, 0, 1, 0], [], []>} : vector<8x8xbf16>, vector<8x8xbf16>, vector<8x8xf32> -> vector<8x8xf32>
    %cst_23 = arith.constant 0.353553385 : f32
    %58 = vector.broadcast %cst_23 : f32 to vector<8x8xf32>
    %59 = arith.mulf %57, %58 : vector<8x8xf32>
    %60 = arith.addf %59, %18 : vector<8x8xf32>
    %61 = vector.extract_strided_slice %13 {offsets = [8, 24], sizes = [8, 8], strides = [1, 1]} : vector<16x32xbf16> to vector<8x8xbf16>
    %62 = vector.extract_strided_slice %15 {offsets = [8, 24], sizes = [8, 8], strides = [1, 1]} : vector<16x32xbf16> to vector<8x8xbf16>
    %cst_24 = arith.constant dense<0.000000e+00> : vector<8x8xf32>
    %63 = tpu.matmul %61, %62, %cst_24 {dimension_numbers = #tpu.dot_dimension_numbers<[1], [1], [0], [0], [0, 0, 1, 0], [], []>} : vector<8x8xbf16>, vector<8x8xbf16>, vector<8x8xf32> -> vector<8x8xf32>
    %cst_25 = arith.constant 0.353553385 : f32
    %64 = vector.broadcast %cst_25 : f32 to vector<8x8xf32>
    %65 = arith.mulf %63, %64 : vector<8x8xf32>
    %66 = arith.addf %65, %18 : vector<8x8xf32>
    %67 = tpu.concatenate %24, %30, %36, %42, %48, %54, %60, %66 in 0 : vector<8x8xf32>, vector<8x8xf32>, vector<8x8xf32>, vector<8x8xf32>, vector<8x8xf32>, vector<8x8xf32>, vector<8x8xf32>, vector<8x8xf32> -> vector<64x8xf32>
    %cst_26 = arith.constant dense<0xFF800000> : vector<64xf32>
    %68 = vector.multi_reduction <maximumf>, %67, %cst_26 [1] : vector<64x8xf32> to vector<64xf32>
    %69 = vector.shape_cast %68 : vector<64xf32> to vector<64x1xf32>
    %70 = vector.broadcast %69 : vector<64x1xf32> to vector<64x8xf32>
    %71 = arith.subf %67, %70 : vector<64x8xf32>
    %72 = math.exp %71 : vector<64x8xf32>
    %cst_27 = arith.constant dense<0.000000e+00> : vector<64xf32>
    %73 = vector.multi_reduction <add>, %72, %cst_27 [1] : vector<64x8xf32> to vector<64xf32>
    %74 = vector.shape_cast %73 : vector<64xf32> to vector<64x1xf32>
    %75 = tpu.reciprocal %74 {approx = true} : vector<64x1xf32> -> vector<64x1xf32>
    %76 = vector.broadcast %75 : vector<64x1xf32> to vector<64x8xf32>
    %77 = arith.mulf %72, %76 : vector<64x8xf32>
    %c0_28 = arith.constant 0 : index
    %c0_29 = arith.constant 0 : index
    %c0_30 = arith.constant 0 : index
    %78 = vector.load %arg16[%c0_28, %c0_29, %c0_30] : memref<1x64x8xf32, #tpu.memory_space<vmem>>, vector<1x64x8xf32>
    %79 = vector.shape_cast %78 : vector<1x64x8xf32> to vector<64x8xf32>
    %80 = vector.shape_cast %77 : vector<64x8xf32> to vector<1x64x8xf32>
    tpu.vector_store %arg16[%c0_28, %c0_29, %c0_30], %80 {strides = array<i32>} : memref<1x64x8xf32, #tpu.memory_space<vmem>>, vector<1x64x8xf32>,
    %81 = arith.truncf %77 : vector<64x8xf32> to vector<64x8xbf16>
    %82 = vector.extract_strided_slice %81 {offsets = [0, 0], sizes = [8, 8], strides = [1, 1]} : vector<64x8xbf16> to vector<8x8xbf16>
    %83 = vector.extract_strided_slice %17 {offsets = [0, 0], sizes = [8, 8], strides = [1, 1]} : vector<16x32xbf16> to vector<8x8xbf16>
    %cst_31 = arith.constant dense<0.000000e+00> : vector<8x8xf32>
    %84 = tpu.matmul %82, %83, %cst_31 {dimension_numbers = #tpu.dot_dimension_numbers<[1], [0], [0], [1], [0, 0, 1, 1], [], []>} : vector<8x8xbf16>, vector<8x8xbf16>, vector<8x8xf32> -> vector<8x8xf32>
    %85 = vector.extract_strided_slice %81 {offsets = [8, 0], sizes = [8, 8], strides = [1, 1]} : vector<64x8xbf16> to vector<8x8xbf16>
    %86 = vector.extract_strided_slice %17 {offsets = [0, 8], sizes = [8, 8], strides = [1, 1]} : vector<16x32xbf16> to vector<8x8xbf16>
    %cst_32 = arith.constant dense<0.000000e+00> : vector<8x8xf32>
    %87 = tpu.matmul %85, %86, %cst_32 {dimension_numbers = #tpu.dot_dimension_numbers<[1], [0], [0], [1], [0, 0, 1, 1], [], []>} : vector<8x8xbf16>, vector<8x8xbf16>, vector<8x8xf32> -> vector<8x8xf32>
    %88 = vector.extract_strided_slice %81 {offsets = [16, 0], sizes = [8, 8], strides = [1, 1]} : vector<64x8xbf16> to vector<8x8xbf16>
    %89 = vector.extract_strided_slice %17 {offsets = [0, 16], sizes = [8, 8], strides = [1, 1]} : vector<16x32xbf16> to vector<8x8xbf16>
    %cst_33 = arith.constant dense<0.000000e+00> : vector<8x8xf32>
    %90 = tpu.matmul %88, %89, %cst_33 {dimension_numbers = #tpu.dot_dimension_numbers<[1], [0], [0], [1], [0, 0, 1, 1], [], []>} : vector<8x8xbf16>, vector<8x8xbf16>, vector<8x8xf32> -> vector<8x8xf32>
    %91 = vector.extract_strided_slice %81 {offsets = [24, 0], sizes = [8, 8], strides = [1, 1]} : vector<64x8xbf16> to vector<8x8xbf16>
    %92 = vector.extract_strided_slice %17 {offsets = [0, 24], sizes = [8, 8], strides = [1, 1]} : vector<16x32xbf16> to vector<8x8xbf16>
    %cst_34 = arith.constant dense<0.000000e+00> : vector<8x8xf32>
    %93 = tpu.matmul %91, %92, %cst_34 {dimension_numbers = #tpu.dot_dimension_numbers<[1], [0], [0], [1], [0, 0, 1, 1], [], []>} : vector<8x8xbf16>, vector<8x8xbf16>, vector<8x8xf32> -> vector<8x8xf32>
    %94 = tpu.concatenate %84, %87, %90, %93 in 1 : vector<8x8xf32>, vector<8x8xf32>, vector<8x8xf32>, vector<8x8xf32> -> vector<8x32xf32>
    %95 = vector.extract_strided_slice %81 {offsets = [32, 0], sizes = [8, 8], strides = [1, 1]} : vector<64x8xbf16> to vector<8x8xbf16>
    %96 = vector.extract_strided_slice %17 {offsets = [8, 0], sizes = [8, 8], strides = [1, 1]} : vector<16x32xbf16> to vector<8x8xbf16>
    %cst_35 = arith.constant dense<0.000000e+00> : vector<8x8xf32>
    %97 = tpu.matmul %95, %96, %cst_35 {dimension_numbers = #tpu.dot_dimension_numbers<[1], [0], [0], [1], [0, 0, 1, 1], [], []>} : vector<8x8xbf16>, vector<8x8xbf16>, vector<8x8xf32> -> vector<8x8xf32>
    %98 = vector.extract_strided_slice %81 {offsets = [40, 0], sizes = [8, 8], strides = [1, 1]} : vector<64x8xbf16> to vector<8x8xbf16>
    %99 = vector.extract_strided_slice %17 {offsets = [8, 8], sizes = [8, 8], strides = [1, 1]} : vector<16x32xbf16> to vector<8x8xbf16>
    %cst_36 = arith.constant dense<0.000000e+00> : vector<8x8xf32>
    %100 = tpu.matmul %98, %99, %cst_36 {dimension_numbers = #tpu.dot_dimension_numbers<[1], [0], [0], [1], [0, 0, 1, 1], [], []>} : vector<8x8xbf16>, vector<8x8xbf16>, vector<8x8xf32> -> vector<8x8xf32>
    %101 = vector.extract_strided_slice %81 {offsets = [48, 0], sizes = [8, 8], strides = [1, 1]} : vector<64x8xbf16> to vector<8x8xbf16>
    %102 = vector.extract_strided_slice %17 {offsets = [8, 16], sizes = [8, 8], strides = [1, 1]} : vector<16x32xbf16> to vector<8x8xbf16>
    %cst_37 = arith.constant dense<0.000000e+00> : vector<8x8xf32>
    %103 = tpu.matmul %101, %102, %cst_37 {dimension_numbers = #tpu.dot_dimension_numbers<[1], [0], [0], [1], [0, 0, 1, 1], [], []>} : vector<8x8xbf16>, vector<8x8xbf16>, vector<8x8xf32> -> vector<8x8xf32>
    %104 = vector.extract_strided_slice %81 {offsets = [56, 0], sizes = [8, 8], strides = [1, 1]} : vector<64x8xbf16> to vector<8x8xbf16>
    %105 = vector.extract_strided_slice %17 {offsets = [8, 24], sizes = [8, 8], strides = [1, 1]} : vector<16x32xbf16> to vector<8x8xbf16>
    %cst_38 = arith.constant dense<0.000000e+00> : vector<8x8xf32>
    %106 = tpu.matmul %104, %105, %cst_38 {dimension_numbers = #tpu.dot_dimension_numbers<[1], [0], [0], [1], [0, 0, 1, 1], [], []>} : vector<8x8xbf16>, vector<8x8xbf16>, vector<8x8xf32> -> vector<8x8xf32>
    %107 = tpu.concatenate %97, %100, %103, %106 in 1 : vector<8x8xf32>, vector<8x8xf32>, vector<8x8xf32>, vector<8x8xf32> -> vector<8x32xf32>
    %108 = tpu.concatenate %94, %107 in 0 : vector<8x32xf32>, vector<8x32xf32> -> vector<16x32xf32>
    %109 = arith.truncf %108 : vector<16x32xf32> to vector<16x32xbf16>
    %c0_39 = arith.constant 0 : index
    %c0_40 = arith.constant 0 : index
    %c0_41 = arith.constant 0 : index
    %110 = vector.load %arg5[%c0_39, %c0_40, %c0_41] : memref<1x32x32xbf16, #tpu.memory_space<vmem>>, vector<1x32x32xbf16>
    %111 = vector.shape_cast %110 : vector<1x32x32xbf16> to vector<32x32xbf16>
    %cst_42 = arith.constant dense<0.000000e+00> : vector<16x32xf32>
    %112 = tpu.matmul %109, %111, %cst_42 {dimension_numbers = #tpu.dot_dimension_numbers<[1], [0], [0], [1], [0, 0, 1, 1], [], []>} : vector<16x32xbf16>, vector<32x32xbf16>, vector<16x32xf32> -> vector<16x32xf32>
    %c0_43 = arith.constant 0 : index
    %c0_44 = arith.constant 0 : index
    %c0_45 = arith.constant 0 : index
    %113 = vector.load %arg6[%c0_43, %c0_44, %c0_45] : memref<1x1x32xf32, #tpu.memory_space<vmem>>, vector<1x1x32xf32>
    %114 = vector.shape_cast %113 : vector<1x1x32xf32> to vector<1x32xf32>
    %115 = vector.broadcast %114 : vector<1x32xf32> to vector<16x32xf32>
    %116 = arith.addf %112, %115 : vector<16x32xf32>
    %117 = arith.addf %3, %116 : vector<16x32xf32>
    %c0_46 = arith.constant 0 : index
    %c0_47 = arith.constant 0 : index
    %c0_48 = arith.constant 0 : index
    %118 = vector.load %arg7[%c0_46, %c0_47, %c0_48] : memref<1x1x32xf32, #tpu.memory_space<vmem>>, vector<1x1x32xf32>
    %119 = vector.shape_cast %118 : vector<1x1x32xf32> to vector<1x32xf32>
    %c0_49 = arith.constant 0 : index
    %c0_50 = arith.constant 0 : index
    %c0_51 = arith.constant 0 : index
    %120 = vector.load %arg8[%c0_49, %c0_50, %c0_51] : memref<1x1x32xf32, #tpu.memory_space<vmem>>, vector<1x1x32xf32>
    %121 = vector.shape_cast %120 : vector<1x1x32xf32> to vector<1x32xf32>
    %cst_52 = arith.constant dense<0.000000e+00> : vector<16xf32>
    %122 = vector.multi_reduction <add>, %117, %cst_52 [1] : vector<16x32xf32> to vector<16xf32>
    %123 = vector.shape_cast %122 : vector<16xf32> to vector<16x1xf32>
    %cst_53 = arith.constant 3.200000e+01 : f32
    %124 = vector.broadcast %cst_53 : f32 to vector<16x1xf32>
    %125 = arith.divf %123, %124 : vector<16x1xf32>
    %126 = vector.broadcast %125 : vector<16x1xf32> to vector<16x32xf32>
    %127 = arith.subf %117, %126 : vector<16x32xf32>
    %128 = arith.mulf %127, %127 : vector<16x32xf32>
    %cst_54 = arith.constant dense<0.000000e+00> : vector<16xf32>
    %129 = vector.multi_reduction <add>, %128, %cst_54 [1] : vector<16x32xf32> to vector<16xf32>
    %130 = vector.shape_cast %129 : vector<16xf32> to vector<16x1xf32>
    %cst_55 = arith.constant 3.200000e+01 : f32
    %131 = vector.broadcast %cst_55 : f32 to vector<16x1xf32>
    %132 = arith.divf %130, %131 : vector<16x1xf32>
    %133 = vector.broadcast %125 : vector<16x1xf32> to vector<16x32xf32>
    %134 = arith.subf %117, %133 : vector<16x32xf32>
    %cst_56 = arith.constant 9.99999974E-6 : f32
    %135 = vector.broadcast %cst_56 : f32 to vector<16x1xf32>
    %136 = arith.addf %132, %135 : vector<16x1xf32>
    %137 = math.rsqrt %136 : vector<16x1xf32>
    %138 = vector.broadcast %137 : vector<16x1xf32> to vector<16x32xf32>
    %139 = arith.mulf %134, %138 : vector<16x32xf32>
    %140 = vector.broadcast %119 : vector<1x32xf32> to vector<16x32xf32>
    %141 = arith.mulf %139, %140 : vector<16x32xf32>
    %142 = vector.broadcast %121 : vector<1x32xf32> to vector<16x32xf32>
    %143 = arith.addf %141, %142 : vector<16x32xf32>
    %144 = arith.truncf %143 : vector<16x32xf32> to vector<16x32xbf16>
    %c0_57 = arith.constant 0 : index
    %c0_58 = arith.constant 0 : index
    %c0_59 = arith.constant 0 : index
    %145 = vector.load %arg9[%c0_57, %c0_58, %c0_59] : memref<1x32x64xbf16, #tpu.memory_space<vmem>>, vector<1x32x64xbf16>
    %146 = vector.shape_cast %145 : vector<1x32x64xbf16> to vector<32x64xbf16>
    %cst_60 = arith.constant dense<0.000000e+00> : vector<16x64xf32>
    %147 = tpu.matmul %144, %146, %cst_60 {dimension_numbers = #tpu.dot_dimension_numbers<[1], [0], [0], [1], [0, 0, 1, 1], [], []>} : vector<16x32xbf16>, vector<32x64xbf16>, vector<16x64xf32> -> vector<16x64xf32>
    %c0_61 = arith.constant 0 : index
    %c0_62 = arith.constant 0 : index
    %c0_63 = arith.constant 0 : index
    %148 = vector.load %arg10[%c0_61, %c0_62, %c0_63] : memref<1x1x64xf32, #tpu.memory_space<vmem>>, vector<1x1x64xf32>
    %149 = vector.shape_cast %148 : vector<1x1x64xf32> to vector<1x64xf32>
    %150 = vector.broadcast %149 : vector<1x64xf32> to vector<16x64xf32>
    %151 = arith.addf %147, %150 : vector<16x64xf32>
    %cst_64 = arith.constant 0.000000e+00 : f32
    %152 = vector.broadcast %cst_64 : f32 to vector<16x64xf32>
    %153 = arith.maximumf %151, %152 : vector<16x64xf32>
    %154 = arith.truncf %153 : vector<16x64xf32> to vector<16x64xbf16>
    %c0_65 = arith.constant 0 : index
    %c0_66 = arith.constant 0 : index
    %c0_67 = arith.constant 0 : index
    %155 = vector.load %arg11[%c0_65, %c0_66, %c0_67] : memref<1x64x32xbf16, #tpu.memory_space<vmem>>, vector<1x64x32xbf16>
    %156 = vector.shape_cast %155 : vector<1x64x32xbf16> to vector<64x32xbf16>
    %cst_68 = arith.constant dense<0.000000e+00> : vector<16x32xf32>
    %157 = tpu.matmul %154, %156, %cst_68 {dimension_numbers = #tpu.dot_dimension_numbers<[1], [0], [0], [1], [0, 0, 1, 1], [], []>} : vector<16x64xbf16>, vector<64x32xbf16>, vector<16x32xf32> -> vector<16x32xf32>
    %c0_69 = arith.constant 0 : index
    %c0_70 = arith.constant 0 : index
    %c0_71 = arith.constant 0 : index
    %158 = vector.load %arg12[%c0_69, %c0_70, %c0_71] : memref<1x1x32xf32, #tpu.memory_space<vmem>>, vector<1x1x32xf32>
    %159 = vector.shape_cast %158 : vector<1x1x32xf32> to vector<1x32xf32>
    %160 = vector.broadcast %159 : vector<1x32xf32> to vector<16x32xf32>
    %161 = arith.addf %157, %160 : vector<16x32xf32>
    %162 = arith.addf %143, %161 : vector<16x32xf32>
    %c0_72 = arith.constant 0 : index
    %c0_73 = arith.constant 0 : index
    %c0_74 = arith.constant 0 : index
    %163 = vector.load %arg13[%c0_72, %c0_73, %c0_74] : memref<1x1x32xf32, #tpu.memory_space<vmem>>, vector<1x1x32xf32>
    %164 = vector.shape_cast %163 : vector<1x1x32xf32> to vector<1x32xf32>
    %c0_75 = arith.constant 0 : index
    %c0_76 = arith.constant 0 : index
    %c0_77 = arith.constant 0 : index
    %165 = vector.load %arg14[%c0_75, %c0_76, %c0_77] : memref<1x1x32xf32, #tpu.memory_space<vmem>>, vector<1x1x32xf32>
    %166 = vector.shape_cast %165 : vector<1x1x32xf32> to vector<1x32xf32>
    %cst_78 = arith.constant dense<0.000000e+00> : vector<16xf32>
    %167 = vector.multi_reduction <add>, %162, %cst_78 [1] : vector<16x32xf32> to vector<16xf32>
    %168 = vector.shape_cast %167 : vector<16xf32> to vector<16x1xf32>
    %cst_79 = arith.constant 3.200000e+01 : f32
    %169 = vector.broadcast %cst_79 : f32 to vector<16x1xf32>
    %170 = arith.divf %168, %169 : vector<16x1xf32>
    %171 = vector.broadcast %170 : vector<16x1xf32> to vector<16x32xf32>
    %172 = arith.subf %162, %171 : vector<16x32xf32>
    %173 = arith.mulf %172, %172 : vector<16x32xf32>
    %cst_80 = arith.constant dense<0.000000e+00> : vector<16xf32>
    %174 = vector.multi_reduction <add>, %173, %cst_80 [1] : vector<16x32xf32> to vector<16xf32>
    %175 = vector.shape_cast %174 : vector<16xf32> to vector<16x1xf32>
    %cst_81 = arith.constant 3.200000e+01 : f32
    %176 = vector.broadcast %cst_81 : f32 to vector<16x1xf32>
    %177 = arith.divf %175, %176 : vector<16x1xf32>
    %178 = vector.broadcast %170 : vector<16x1xf32> to vector<16x32xf32>
    %179 = arith.subf %162, %178 : vector<16x32xf32>
    %cst_82 = arith.constant 9.99999974E-6 : f32
    %180 = vector.broadcast %cst_82 : f32 to vector<16x1xf32>
    %181 = arith.addf %177, %180 : vector<16x1xf32>
    %182 = math.rsqrt %181 : vector<16x1xf32>
    %183 = vector.broadcast %182 : vector<16x1xf32> to vector<16x32xf32>
    %184 = arith.mulf %179, %183 : vector<16x32xf32>
    %185 = vector.broadcast %164 : vector<1x32xf32> to vector<16x32xf32>
    %186 = arith.mulf %184, %185 : vector<16x32xf32>
    %187 = vector.broadcast %166 : vector<1x32xf32> to vector<16x32xf32>
    %188 = arith.addf %186, %187 : vector<16x32xf32>
    %c0_83 = arith.constant 0 : index
    %c0_84 = arith.constant 0 : index
    %c0_85 = arith.constant 0 : index
    %189 = vector.load %arg15[%c0_83, %c0_84, %c0_85] : memref<1x16x32xf32, #tpu.memory_space<vmem>>, vector<1x16x32xf32>
    %190 = vector.shape_cast %189 : vector<1x16x32xf32> to vector<16x32xf32>
    %191 = vector.shape_cast %188 : vector<16x32xf32> to vector<1x16x32xf32>
    tpu.vector_store %arg15[%c0_83, %c0_84, %c0_85], %191 {strides = array<i32>} : memref<1x16x32xf32, #tpu.memory_space<vmem>>, vector<1x16x32xf32>,
    %c0_86 = arith.constant 0 : index
    %c0_87 = arith.constant 0 : index
    %192 = vector.load %arg17[%c0_86, %c0_87] : memref<16x32xf32, #tpu.memory_space<vmem>>, vector<16x32xf32>
    tpu.vector_store %arg17[%c0_86, %c0_87], %188 {strides = array<i32>} : memref<16x32xf32, #tpu.memory_space<vmem>>, vector<16x32xf32>,
    return
  }
  func.func @transform_0(%arg0: i32) -> (i32, i32) {
    %c0_i32 = arith.constant 0 : i32
    %c0_i32_0 = arith.constant 0 : i32
    %c0_i32_1 = arith.constant 0 : i32
    return %c0_i32, %c0_i32_0 : i32, i32
  }
  func.func @transform_1(%arg0: i32) -> (i32, i32) {
    %c0_i32 = arith.constant 0 : i32
    %c0_i32_0 = arith.constant 0 : i32
    %c0_i32_1 = arith.constant 0 : i32
    return %c0_i32, %c0_i32_0 : i32, i32
  }
  func.func @transform_2(%arg0: i32) -> (i32, i32, i32) {
    %c0_i32 = arith.constant 0 : i32
    %c0_i32_0 = arith.constant 0 : i32
    %c0_i32_1 = arith.constant 0 : i32
    return %arg0, %c0_i32, %c0_i32_0 : i32, i32, i32
  }
  func.func @transform_3(%arg0: i32) -> (i32, i32, i32) {
    %c0_i32 = arith.constant 0 : i32
    %c0_i32_0 = arith.constant 0 : i32
    %c0_i32_1 = arith.constant 0 : i32
    return %arg0, %c0_i32, %c0_i32_0 : i32, i32, i32
  }
  func.func @transform_4(%arg0: i32) -> (i32, i32, i32) {
    %c0_i32 = arith.constant 0 : i32
    %c0_i32_0 = arith.constant 0 : i32
    %c0_i32_1 = arith.constant 0 : i32
    return %arg0, %c0_i32, %c0_i32_0 : i32, i32, i32
  }
  func.func @transform_5(%arg0: i32) -> (i32, i32, i32) {
    %c0_i32 = arith.constant 0 : i32
    %c0_i32_0 = arith.constant 0 : i32
    %c0_i32_1 = arith.constant 0 : i32
    return %arg0, %c0_i32, %c0_i32_0 : i32, i32, i32
  }
  func.func @transform_6(%arg0: i32) -> (i32, i32, i32) {
    %c0_i32 = arith.constant 0 : i32
    %c0_i32_0 = arith.constant 0 : i32
    %c0_i32_1 = arith.constant 0 : i32
    return %arg0, %c0_i32, %c0_i32_0 : i32, i32, i32
  }
  func.func @transform_7(%arg0: i32) -> (i32, i32, i32) {
    %c0_i32 = arith.constant 0 : i32
    %c0_i32_0 = arith.constant 0 : i32
    %c0_i32_1 = arith.constant 0 : i32
    return %arg0, %c0_i32, %c0_i32_0 : i32, i32, i32
  }
  func.func @transform_8(%arg0: i32) -> (i32, i32, i32) {
    %c0_i32 = arith.constant 0 : i32
    %c0_i32_0 = arith.constant 0 : i32
    %c0_i32_1 = arith.constant 0 : i32
    return %arg0, %c0_i32, %c0_i32_0 : i32, i32, i32
  }
  func.func @transform_9(%arg0: i32) -> (i32, i32, i32) {
    %c0_i32 = arith.constant 0 : i32
    %c0_i32_0 = arith.constant 0 : i32
    %c0_i32_1 = arith.constant 0 : i32
    return %arg0, %c0_i32, %c0_i32_0 : i32, i32, i32
  }
  func.func @transform_10(%arg0: i32) -> (i32, i32, i32) {
    %c0_i32 = arith.constant 0 : i32
    %c0_i32_0 = arith.constant 0 : i32
    %c0_i32_1 = arith.constant 0 : i32
    return %arg0, %c0_i32, %c0_i32_0 : i32, i32, i32
  }
  func.func @transform_11(%arg0: i32) -> (i32, i32, i32) {
    %c0_i32 = arith.constant 0 : i32
    %c0_i32_0 = arith.constant 0 : i32
    %c0_i32_1 = arith.constant 0 : i32
    return %arg0, %c0_i32, %c0_i32_0 : i32, i32, i32
  }
  func.func @transform_12(%arg0: i32) -> (i32, i32, i32) {
    %c0_i32 = arith.constant 0 : i32
    %c0_i32_0 = arith.constant 0 : i32
    %c0_i32_1 = arith.constant 0 : i32
    return %arg0, %c0_i32, %c0_i32_0 : i32, i32, i32
  }
  func.func @transform_13(%arg0: i32) -> (i32, i32, i32) {
    %c0_i32 = arith.constant 0 : i32
    %c0_i32_0 = arith.constant 0 : i32
    %c0_i32_1 = arith.constant 0 : i32
    return %arg0, %c0_i32, %c0_i32_0 : i32, i32, i32
  }
  func.func @transform_14(%arg0: i32) -> (i32, i32, i32) {
    %c0_i32 = arith.constant 0 : i32
    %c0_i32_0 = arith.constant 0 : i32
    %c0_i32_1 = arith.constant 0 : i32
    return %arg0, %c0_i32, %c0_i32_0 : i32, i32, i32
  }
  func.func @transform_15(%arg0: i32) -> (i32, i32, i32) {
    %c0_i32 = arith.constant 0 : i32
    %c0_i32_0 = arith.constant 0 : i32
    %c0_i32_1 = arith.constant 0 : i32
    return %arg0, %c0_i32, %c0_i32_0 : i32, i32, i32
  }
}

</mosaic_0001>

<llo_original>
// kernel: tpu_custom_call.1
$region0: #{tpu_custom_call.1}
  #allocation0 [shape = 'u32[]', space=smem, size = 0x4, offset = 0x4, fixed_abs, tag = 'smem constant byte address 0x4 - core index']
  #allocation1 [shape = 'u32[144,128]{1,0:T(1,128)}', space=vmem, size = 0x12000, scoped, tag = 'internal scratch']
  #allocation2 [shape = 'f32[16,32]{1,0:T(8,128)}', space=vmem, size = 0x2000, scoped, tag = 'scratch operand']
  %s0 = inlined_call_operand.hbm [shape: f32[16,32], index: 0, kind: input, shape index: {}]
  %s1 = inlined_call_operand.hbm [shape: f32[8,8], index: 1, kind: input, shape index: {}]
  %s2 = inlined_call_operand.vmem [shape: bf16[2,32,96], index: 2, kind: input, shape index: {}]
  %s3 = inlined_call_operand.vmem [shape: f32[2,1,96], index: 3, kind: input, shape index: {}]
  %s4 = inlined_call_operand.vmem [shape: bf16[2,32,32], index: 4, kind: input, shape index: {}]
  %s5 = inlined_call_operand.vmem [shape: f32[2,1,32], index: 5, kind: input, shape index: {}]
  %s6 = inlined_call_operand.hbm [shape: f32[2,1,32], index: 6, kind: input, shape index: {}]
  %s7 = inlined_call_operand.hbm [shape: f32[2,1,32], index: 7, kind: input, shape index: {}]
  %s8 = inlined_call_operand.vmem [shape: bf16[2,32,64], index: 8, kind: input, shape index: {}]
  %s9 = inlined_call_operand.hbm [shape: f32[2,1,64], index: 9, kind: input, shape index: {}]
  %s10 = inlined_call_operand.vmem [shape: bf16[2,64,32], index: 10, kind: input, shape index: {}]
  %s11 = inlined_call_operand.vmem [shape: f32[2,1,32], index: 11, kind: input, shape index: {}]
  %s12 = inlined_call_operand.vmem [shape: f32[2,1,32], index: 12, kind: input, shape index: {}]
  %s13 = inlined_call_operand.vmem [shape: f32[2,1,32], index: 13, kind: input, shape index: {}]
  %s14 = inlined_call_operand.hbm [shape: f32[2,16,32], index: 14, kind: output, shape index: {0}]
  %s15 = inlined_call_operand.vmem [shape: f32[2,64,8], index: 15, kind: output, shape index: {1}]
  %16 = xla_tuple %s14, %s15
  %s17 = sld [smem:[#allocation0]]
  $region121: #{tpu_custom_call.1} parent=0
    _
  %s19 = ssub.s32 1, %s17
  %s20 = scalar_select 0, %s19, %s17
  $region1: #{tpu_custom_call.1} parent=0
    #allocation3 [shape = 'u8[8192]{0}', space=vmem, size = 0x2000, scoped, tag = 'input window, operand 0, single buffered']
    #allocation4 [shape = 's32[2]{0}', space=sflag, size = 0x8, scoped, tag = 'scoped memory for tpu_custom_call.1']
    #allocation5 [shape = 's32[2]{0}', space=sflag, size = 0x8, scoped, tag = 'scoped memory for tpu_custom_call.1']
    #allocation6 [shape = 'u8[4096]{0}', space=vmem, size = 0x1000, scoped, tag = 'input window, operand 1, single buffered']
    #allocation7 [shape = 's32[1]{0}', space=sflag, size = 0x4, scoped, tag = 'scoped memory for tpu_custom_call.1']
    #allocation8 [shape = 'u8[1024]{0}', space=vmem, size = 0x400, scoped, tag = 'input window, operand 6']
    #allocation9 [shape = 'u8[1024]{0}', space=vmem, size = 0x400, scoped, tag = 'input window, operand 7']
    #allocation10 [shape = 'u8[1024]{0}', space=vmem, size = 0x400, scoped, tag = 'input window, operand 9']
    #allocation11 [shape = 'u8[16384]{0}', space=vmem, size = 0x4000, scoped, tag = 'output window, operand 0']
    %21 = vsyncpa [#allocation4], 0
    %22 = vsyncpa [#allocation7], 0
    %23 = vsyncpa [#allocation5], 0
    %s24 = scalar_lea.sflag [#allocation5], 1
    %25 = vsyncpa %s24, 0
    loop: start=0, step=1, limit=4
    $region2: #{tpu_custom_call.1} parent=1 // loop_pre_header
      _
    $region3: #{tpu_custom_call.1} parent=1 // loop_header
      %s27 = sphi 0, %s31
      %p28 = scmp.ge.s32.totalorder %s27, 4
      %s35 = sphi 0, %s35
      %s37 = sphi 0, %s35
      %s38 = sphi 0, %s37
      %s52 = sphi 0, %s38
      %s56 = sphi 0, %s56
      %s58 = sphi 0, %s56
      %s59 = sphi 0, %s58
      %s73 = sphi 0, %s59
      %s79 = sphi 0, %s81
      %s82 = sphi 0, %s79
      %s83 = sphi 0, %s82
      %s99 = sphi 0, %s83
      %s105 = sphi 0, %s107
      %s108 = sphi 0, %s105
      %s109 = sphi 0, %s108
      %s125 = sphi 0, %s109
      %s131 = sphi 0, %s133
      %s134 = sphi 0, %s131
      %s135 = sphi 0, %s134
      %s151 = sphi 0, %s135
      %s157 = sphi 0, %s159
      %s160 = sphi 0, %s157
      %s161 = sphi 0, %s160
      %s177 = sphi 0, %s161
      %s183 = sphi 0, %s185
      %s186 = sphi 0, %s183
      %s187 = sphi 0, %s186
      %s203 = sphi 0, %s187
      %s209 = sphi 0, %s211
      %s212 = sphi 0, %s209
      %s213 = sphi 0, %s212
      %s229 = sphi 0, %s213
      %s235 = sphi 0, %s237
      %s238 = sphi 0, %s235
      %s239 = sphi 0, %s238
      %s255 = sphi 0, %s239
      %s261 = sphi 0, %s263
      %s264 = sphi 0, %s261
      %s265 = sphi 0, %s264
      %s281 = sphi 0, %s265
      %s287 = sphi 0, %s289
      %s290 = sphi 0, %s287
      %s291 = sphi 0, %s290
      %s307 = sphi 0, %s291
      %s313 = sphi 0, %s315
      %s316 = sphi 0, %s313
      %s317 = sphi 0, %s316
      %s333 = sphi 0, %s317
      %s339 = sphi 0, %s341
      %s342 = sphi 0, %s339
      %s343 = sphi 0, %s342
      %s359 = sphi 0, %s343
      %s365 = sphi 0, %s367
      %s368 = sphi 0, %s365
      %s369 = sphi 0, %s368
      %s385 = sphi 0, %s369
      %s391 = sphi 0, %s393
      %s394 = sphi 0, %s391
      %s395 = sphi 0, %s394
      %s411 = sphi 0, %s395
      %s417 = sphi 0, %s419
      %s420 = sphi 0, %s417
      %s421 = sphi 0, %s420
      %s437 = sphi 0, %s421
    $region4: #{tpu_custom_call.1} parent=1 // loop_header_branch
      %30 = sbr.rel (%p28) target = $region8
    $region5: #{tpu_custom_call.1} parent=1 // loop_body
      %s32 = ssub.s32 %s27, 1
      %s33 = ssub.s32 %s27, 2
      %s34 = sadd.s32 %s27, 1
      %s36 = sadd.s32 %s35, 1
      %p39 = scmp.eq.s32.totalorder %s27, 1
      %p40 = scmp.ne.s32.totalorder %s35, %s37
      %p41 = scmp.eq.s32.totalorder %s27, 0
      %p42 = por %p40, %p41
      %p43 = scmp.ne.s32.totalorder %s35, %s37
      %p44 = scmp.eq.s32.totalorder %s32, 1
      %p45 = por %p43, %p44
      %p46 = scmp.ne.s32.totalorder %s37, %s38
      %p47 = scmp.eq.s32.totalorder %s32, 0
      %p48 = por %p46, %p47
      %p49 = scmp.ne.s32.totalorder %s37, %s38
      %p50 = scmp.eq.s32.totalorder %s33, 1
      %p51 = por %p49, %p50
      %p53 = scmp.ne.s32.totalorder %s38, %s52
      %p54 = scmp.eq.s32.totalorder %s33, 0
      %p55 = por %p53, %p54
      %s57 = sadd.s32 %s56, 1
      %p60 = scmp.eq.s32.totalorder %s27, 1
      %p61 = scmp.ne.s32.totalorder %s56, %s58
      %p62 = scmp.eq.s32.totalorder %s27, 0
      %p63 = por %p61, %p62
      %p64 = scmp.ne.s32.totalorder %s56, %s58
      %p65 = scmp.eq.s32.totalorder %s32, 1
      %p66 = por %p64, %p65
      %p67 = scmp.ne.s32.totalorder %s58, %s59
      %p68 = scmp.eq.s32.totalorder %s32, 0
      %p69 = por %p67, %p68
      %p70 = scmp.ne.s32.totalorder %s58, %s59
      %p71 = scmp.eq.s32.totalorder %s33, 1
      %p72 = por %p70, %p71
      %p74 = scmp.ne.s32.totalorder %s59, %s73
      %p75 = scmp.eq.s32.totalorder %s33, 0
      %p76 = por %p74, %p75
      %s77 = ssub.s32 %s27, %s34
      %p78 = scmp.eq.s32.totalorder %s77, 0
      %s80 = sadd.s32 %s79, 1
      %s81 = scalar_select %p78, %s79, %s80
      %p84 = pneg %p78
      %p85 = scmp.eq.s32.totalorder %s27, 1
      %p86 = por %p84, %p85
      %p87 = scmp.ne.s32.totalorder %s79, %s82
      %p88 = scmp.eq.s32.totalorder %s27, 0
      %p89 = por %p87, %p88
      %p90 = scmp.ne.s32.totalorder %s79, %s82
      %p91 = scmp.eq.s32.totalorder %s32, 1
      %p92 = por %p90, %p91
      %p93 = scmp.ne.s32.totalorder %s82, %s83
      %p94 = scmp.eq.s32.totalorder %s32, 0
      %p95 = por %p93, %p94
      %p96 = scmp.ne.s32.totalorder %s82, %s83
      %p97 = scmp.eq.s32.totalorder %s33, 1
      %p98 = por %p96, %p97
      %p100 = scmp.ne.s32.totalorder %s83, %s99
      %p101 = scmp.eq.s32.totalorder %s33, 0
      %p102 = por %p100, %p101
      %s103 = ssub.s32 %s27, %s34
      %p104 = scmp.eq.s32.totalorder %s103, 0
      %s106 = sadd.s32 %s105, 1
      %s107 = scalar_select %p104, %s105, %s106
      %p110 = pneg %p104
      %p111 = scmp.eq.s32.totalorder %s27, 1
      %p112 = por %p110, %p111
      %p113 = scmp.ne.s32.totalorder %s105, %s108
      %p114 = scmp.eq.s32.totalorder %s27, 0
      %p115 = por %p113, %p114
      %p116 = scmp.ne.s32.totalorder %s105, %s108
      %p117 = scmp.eq.s32.totalorder %s32, 1
      %p118 = por %p116, %p117
      %p119 = scmp.ne.s32.totalorder %s108, %s109
      %p120 = scmp.eq.s32.totalorder %s32, 0
      %p121 = por %p119, %p120
      %p122 = scmp.ne.s32.totalorder %s108, %s109
      %p123 = scmp.eq.s32.totalorder %s33, 1
      %p124 = por %p122, %p123
      %p126 = scmp.ne.s32.totalorder %s109, %s125
      %p127 = scmp.eq.s32.totalorder %s33, 0
      %p128 = por %p126, %p127
      %s129 = ssub.s32 %s27, %s34
      %p130 = scmp.eq.s32.totalorder %s129, 0
      %s132 = sadd.s32 %s131, 1
      %s133 = scalar_select %p130, %s131, %s132
      %p136 = pneg %p130
      %p137 = scmp.eq.s32.totalorder %s27, 1
      %p138 = por %p136, %p137
      %p139 = scmp.ne.s32.totalorder %s131, %s134
      %p140 = scmp.eq.s32.totalorder %s27, 0
      %p141 = por %p139, %p140
      %p142 = scmp.ne.s32.totalorder %s131, %s134
      %p143 = scmp.eq.s32.totalorder %s32, 1
      %p144 = por %p142, %p143
      %p145 = scmp.ne.s32.totalorder %s134, %s135
      %p146 = scmp.eq.s32.totalorder %s32, 0
      %p147 = por %p145, %p146
      %p148 = scmp.ne.s32.totalorder %s134, %s135
      %p149 = scmp.eq.s32.totalorder %s33, 1
      %p150 = por %p148, %p149
      %p152 = scmp.ne.s32.totalorder %s135, %s151
      %p153 = scmp.eq.s32.totalorder %s33, 0
      %p154 = por %p152, %p153
      %s155 = ssub.s32 %s27, %s34
      %p156 = scmp.eq.s32.totalorder %s155, 0
      %s158 = sadd.s32 %s157, 1
      %s159 = scalar_select %p156, %s157, %s158
      %p162 = pneg %p156
      %p163 = scmp.eq.s32.totalorder %s27, 1
      %p164 = por %p162, %p163
      %p165 = scmp.ne.s32.totalorder %s157, %s160
      %p166 = scmp.eq.s32.totalorder %s27, 0
      %p167 = por %p165, %p166
      %p168 = scmp.ne.s32.totalorder %s157, %s160
      %p169 = scmp.eq.s32.totalorder %s32, 1
      %p170 = por %p168, %p169
      %p171 = scmp.ne.s32.totalorder %s160, %s161
      %p172 = scmp.eq.s32.totalorder %s32, 0
      %p173 = por %p171, %p172
      %p174 = scmp.ne.s32.totalorder %s160, %s161
      %p175 = scmp.eq.s32.totalorder %s33, 1
      %p176 = por %p174, %p175
      %p178 = scmp.ne.s32.totalorder %s161, %s177
      %p179 = scmp.eq.s32.totalorder %s33, 0
      %p180 = por %p178, %p179
      %s181 = ssub.s32 %s27, %s34
      %p182 = scmp.eq.s32.totalorder %s181, 0
      %s184 = sadd.s32 %s183, 1
      %s185 = scalar_select %p182, %s183, %s184
      %p188 = pneg %p182
      %p189 = scmp.eq.s32.totalorder %s27, 1
      %p190 = por %p188, %p189
      %p191 = scmp.ne.s32.totalorder %s183, %s186
      %p192 = scmp.eq.s32.totalorder %s27, 0
      %p193 = por %p191, %p192
      %p194 = scmp.ne.s32.totalorder %s183, %s186
      %p195 = scmp.eq.s32.totalorder %s32, 1
      %p196 = por %p194, %p195
      %p197 = scmp.ne.s32.totalorder %s186, %s187
      %p198 = scmp.eq.s32.totalorder %s32, 0
      %p199 = por %p197, %p198
      %p200 = scmp.ne.s32.totalorder %s186, %s187
      %p201 = scmp.eq.s32.totalorder %s33, 1
      %p202 = por %p200, %p201
      %p204 = scmp.ne.s32.totalorder %s187, %s203
      %p205 = scmp.eq.s32.totalorder %s33, 0
      %p206 = por %p204, %p205
      %s207 = ssub.s32 %s27, %s34
      %p208 = scmp.eq.s32.totalorder %s207, 0
      %s210 = sadd.s32 %s209, 1
      %s211 = scalar_select %p208, %s209, %s210
      %p214 = pneg %p208
      %p215 = scmp.eq.s32.totalorder %s27, 1
      %p216 = por %p214, %p215
      %p217 = scmp.ne.s32.totalorder %s209, %s212
      %p218 = scmp.eq.s32.totalorder %s27, 0
      %p219 = por %p217, %p218
      %p220 = scmp.ne.s32.totalorder %s209, %s212
      %p221 = scmp.eq.s32.totalorder %s32, 1
      %p222 = por %p220, %p221
      %p223 = scmp.ne.s32.totalorder %s212, %s213
      %p224 = scmp.eq.s32.totalorder %s32, 0
      %p225 = por %p223, %p224
      %p226 = scmp.ne.s32.totalorder %s212, %s213
      %p227 = scmp.eq.s32.totalorder %s33, 1
      %p228 = por %p226, %p227
      %p230 = scmp.ne.s32.totalorder %s213, %s229
      %p231 = scmp.eq.s32.totalorder %s33, 0
      %p232 = por %p230, %p231
      %s233 = ssub.s32 %s27, %s34
      %p234 = scmp.eq.s32.totalorder %s233, 0
      %s236 = sadd.s32 %s235, 1
      %s237 = scalar_select %p234, %s235, %s236
      %p240 = pneg %p234
      %p241 = scmp.eq.s32.totalorder %s27, 1
      %p242 = por %p240, %p241
      %p243 = scmp.ne.s32.totalorder %s235, %s238
      %p244 = scmp.eq.s32.totalorder %s27, 0
      %p245 = por %p243, %p244
      %p246 = scmp.ne.s32.totalorder %s235, %s238
      %p247 = scmp.eq.s32.totalorder %s32, 1
      %p248 = por %p246, %p247
      %p249 = scmp.ne.s32.totalorder %s238, %s239
      %p250 = scmp.eq.s32.totalorder %s32, 0
      %p251 = por %p249, %p250
      %p252 = scmp.ne.s32.totalorder %s238, %s239
      %p253 = scmp.eq.s32.totalorder %s33, 1
      %p254 = por %p252, %p253
      %p256 = scmp.ne.s32.totalorder %s239, %s255
      %p257 = scmp.eq.s32.totalorder %s33, 0
      %p258 = por %p256, %p257
      %s259 = ssub.s32 %s27, %s34
      %p260 = scmp.eq.s32.totalorder %s259, 0
      %s262 = sadd.s32 %s261, 1
      %s263 = scalar_select %p260, %s261, %s262
      %p266 = pneg %p260
      %p267 = scmp.eq.s32.totalorder %s27, 1
      %p268 = por %p266, %p267
      %p269 = scmp.ne.s32.totalorder %s261, %s264
      %p270 = scmp.eq.s32.totalorder %s27, 0
      %p271 = por %p269, %p270
      %p272 = scmp.ne.s32.totalorder %s261, %s264
      %p273 = scmp.eq.s32.totalorder %s32, 1
      %p274 = por %p272, %p273
      %p275 = scmp.ne.s32.totalorder %s264, %s265
      %p276 = scmp.eq.s32.totalorder %s32, 0
      %p277 = por %p275, %p276
      %p278 = scmp.ne.s32.totalorder %s264, %s265
      %p279 = scmp.eq.s32.totalorder %s33, 1
      %p280 = por %p278, %p279
      %p282 = scmp.ne.s32.totalorder %s265, %s281
      %p283 = scmp.eq.s32.totalorder %s33, 0
      %p284 = por %p282, %p283
      %s285 = ssub.s32 %s27, %s34
      %p286 = scmp.eq.s32.totalorder %s285, 0
      %s288 = sadd.s32 %s287, 1
      %s289 = scalar_select %p286, %s287, %s288
      %p292 = pneg %p286
      %p293 = scmp.eq.s32.totalorder %s27, 1
      %p294 = por %p292, %p293
      %p295 = scmp.ne.s32.totalorder %s287, %s290
      %p296 = scmp.eq.s32.totalorder %s27, 0
      %p297 = por %p295, %p296
      %p298 = scmp.ne.s32.totalorder %s287, %s290
      %p299 = scmp.eq.s32.totalorder %s32, 1
      %p300 = por %p298, %p299
      %p301 = scmp.ne.s32.totalorder %s290, %s291
      %p302 = scmp.eq.s32.totalorder %s32, 0
      %p303 = por %p301, %p302
      %p304 = scmp.ne.s32.totalorder %s290, %s291
      %p305 = scmp.eq.s32.totalorder %s33, 1
      %p306 = por %p304, %p305
      %p308 = scmp.ne.s32.totalorder %s291, %s307
      %p309 = scmp.eq.s32.totalorder %s33, 0
      %p310 = por %p308, %p309
      %s311 = ssub.s32 %s27, %s34
      %p312 = scmp.eq.s32.totalorder %s311, 0
      %s314 = sadd.s32 %s313, 1
      %s315 = scalar_select %p312, %s313, %s314
      %p318 = pneg %p312
      %p319 = scmp.eq.s32.totalorder %s27, 1
      %p320 = por %p318, %p319
      %p321 = scmp.ne.s32.totalorder %s313, %s316
      %p322 = scmp.eq.s32.totalorder %s27, 0
      %p323 = por %p321, %p322
      %p324 = scmp.ne.s32.totalorder %s313, %s316
      %p325 = scmp.eq.s32.totalorder %s32, 1
      %p326 = por %p324, %p325
      %p327 = scmp.ne.s32.totalorder %s316, %s317
      %p328 = scmp.eq.s32.totalorder %s32, 0
      %p329 = por %p327, %p328
      %p330 = scmp.ne.s32.totalorder %s316, %s317
      %p331 = scmp.eq.s32.totalorder %s33, 1
      %p332 = por %p330, %p331
      %p334 = scmp.ne.s32.totalorder %s317, %s333
      %p335 = scmp.eq.s32.totalorder %s33, 0
      %p336 = por %p334, %p335
      %s337 = ssub.s32 %s27, %s34
      %p338 = scmp.eq.s32.totalorder %s337, 0
      %s340 = sadd.s32 %s339, 1
      %s341 = scalar_select %p338, %s339, %s340
      %p344 = pneg %p338
      %p345 = scmp.eq.s32.totalorder %s27, 1
      %p346 = por %p344, %p345
      %p347 = scmp.ne.s32.totalorder %s339, %s342
      %p348 = scmp.eq.s32.totalorder %s27, 0
      %p349 = por %p347, %p348
      %p350 = scmp.ne.s32.totalorder %s339, %s342
      %p351 = scmp.eq.s32.totalorder %s32, 1
      %p352 = por %p350, %p351
      %p353 = scmp.ne.s32.totalorder %s342, %s343
      %p354 = scmp.eq.s32.totalorder %s32, 0
      %p355 = por %p353, %p354
      %p356 = scmp.ne.s32.totalorder %s342, %s343
      %p357 = scmp.eq.s32.totalorder %s33, 1
      %p358 = por %p356, %p357
      %p360 = scmp.ne.s32.totalorder %s343, %s359
      %p361 = scmp.eq.s32.totalorder %s33, 0
      %p362 = por %p360, %p361
      %s363 = ssub.s32 %s27, %s34
      %p364 = scmp.eq.s32.totalorder %s363, 0
      %s366 = sadd.s32 %s365, 1
      %s367 = scalar_select %p364, %s365, %s366
      %p370 = pneg %p364
      %p371 = scmp.eq.s32.totalorder %s27, 1
      %p372 = por %p370, %p371
      %p373 = scmp.ne.s32.totalorder %s365, %s368
      %p374 = scmp.eq.s32.totalorder %s27, 0
      %p375 = por %p373, %p374
      %p376 = scmp.ne.s32.totalorder %s365, %s368
      %p377 = scmp.eq.s32.totalorder %s32, 1
      %p378 = por %p376, %p377
      %p379 = scmp.ne.s32.totalorder %s368, %s369
      %p380 = scmp.eq.s32.totalorder %s32, 0
      %p381 = por %p379, %p380
      %p382 = scmp.ne.s32.totalorder %s368, %s369
      %p383 = scmp.eq.s32.totalorder %s33, 1
      %p384 = por %p382, %p383
      %p386 = scmp.ne.s32.totalorder %s369, %s385
      %p387 = scmp.eq.s32.totalorder %s33, 0
      %p388 = por %p386, %p387
      %s389 = ssub.s32 %s27, %s34
      %p390 = scmp.eq.s32.totalorder %s389, 0
      %s392 = sadd.s32 %s391, 1
      %s393 = scalar_select %p390, %s391, %s392
      %p396 = pneg %p390
      %p397 = scmp.eq.s32.totalorder %s27, 1
      %p398 = por %p396, %p397
      %p399 = scmp.ne.s32.totalorder %s391, %s394
      %p400 = scmp.eq.s32.totalorder %s27, 0
      %p401 = por %p399, %p400
      %p402 = scmp.ne.s32.totalorder %s391, %s394
      %p403 = scmp.eq.s32.totalorder %s32, 1
      %p404 = por %p402, %p403
      %p405 = scmp.ne.s32.totalorder %s394, %s395
      %p406 = scmp.eq.s32.totalorder %s32, 0
      %p407 = por %p405, %p406
      %p408 = scmp.ne.s32.totalorder %s394, %s395
      %p409 = scmp.eq.s32.totalorder %s33, 1
      %p410 = por %p408, %p409
      %p412 = scmp.ne.s32.totalorder %s395, %s411
      %p413 = scmp.eq.s32.totalorder %s33, 0
      %p414 = por %p412, %p413
      %s415 = ssub.s32 %s27, %s34
      %p416 = scmp.eq.s32.totalorder %s415, 0
      %s418 = sadd.s32 %s417, 1
      %s419 = scalar_select %p416, %s417, %s418
      %p422 = pneg %p416
      %p423 = scmp.eq.s32.totalorder %s27, 1
      %p424 = por %p422, %p423
      %p425 = scmp.ne.s32.totalorder %s417, %s420
      %p426 = scmp.eq.s32.totalorder %s27, 0
      %p427 = por %p425, %p426
      %p428 = scmp.ne.s32.totalorder %s417, %s420
      %p429 = scmp.eq.s32.totalorder %s32, 1
      %p430 = por %p428, %p429
      %p431 = scmp.ne.s32.totalorder %s420, %s421
      %p432 = scmp.eq.s32.totalorder %s32, 0
      %p433 = por %p431, %p432
      %p434 = scmp.ne.s32.totalorder %s420, %s421
      %p435 = scmp.eq.s32.totalorder %s33, 1
      %p436 = por %p434, %p435
      %p438 = scmp.ne.s32.totalorder %s421, %s437
      %p439 = scmp.eq.s32.totalorder %s33, 0
      %p440 = por %p438, %p439
      %p441 = scmp.le.s32.totalorder 1, %s27
      %p442 = scmp.lt.s32.totalorder %s27, 3
      %p443 = pnand %p441, %p442
      %p444 = pneg %p443
      // Predicated region
      $region9: #{tpu_custom_call.1} parent=5 // pred_check
        _
      $region10: #{tpu_custom_call.1} parent=5 // pred_check_branch
        %446 = sbr.rel (%p443) target = $region12
      $region11: #{tpu_custom_call.1} parent=5 // pred_region
        %s447 = ssub.s32 %s27, 1
        // Predicated region
        $region13: #{tpu_custom_call.1} parent=11 // pred_check
          %p448 = pneg %p48
        $region14: #{tpu_custom_call.1} parent=11 // pred_check_branch
          %450 = sbr.rel (%p448) target = $region16
        $region15: #{tpu_custom_call.1} parent=11 // pred_region
          %s452 = ssub.s32 256, 256
          %453 = vsyncadd [#allocation4], %s452
          %s454 = sshll.u32 [#allocation3], 4
          %s455 = int_to_ptr.vmem [resolvable:$true] %s454
          %460 = dma.hbm_to_vmem [thread:$0]  %s0, 256, %s455, [#allocation4], 128, 128, 8
        $region16: #{tpu_custom_call.1} parent=11 // pred_fallthru
          _
        // Predicated region
        $region17: #{tpu_custom_call.1} parent=11 // pred_check
          %p461 = pneg %p69
        $region18: #{tpu_custom_call.1} parent=11 // pred_check_branch
          %463 = sbr.rel (%p461) target = $region20
        $region19: #{tpu_custom_call.1} parent=11 // pred_region
          %s465 = ssub.s32 128, 128
          %466 = vsyncadd [#allocation7], %s465
          %s468 = sshll.u32 [#allocation6], 4
          %s469 = int_to_ptr.vmem [resolvable:$true] %s468
          %471 = dma.hbm_to_vmem [thread:$0]  %s1, 128, %s469, [#allocation7]
        $region20: #{tpu_custom_call.1} parent=11 // pred_fallthru
          _
      $region12: #{tpu_custom_call.1} parent=5 // pred_fallthru
        _
      %p472 = scmp.lt.s32.totalorder %s27, 2
      // Predicated region
      $region21: #{tpu_custom_call.1} parent=5 // pred_check
        %p473 = pneg %p472
      $region22: #{tpu_custom_call.1} parent=5 // pred_check_branch
        %475 = sbr.rel (%p473) target = $region24
      $region23: #{tpu_custom_call.1} parent=5 // pred_region
        // Predicated region
        $region25: #{tpu_custom_call.1} parent=23 // pred_check
          %p476 = pneg %p89
        $region26: #{tpu_custom_call.1} parent=23 // pred_check_branch
          %478 = sbr.rel (%p476) target = $region28
        $region27: #{tpu_custom_call.1} parent=23 // pred_region
          %p479 = scmp.lt.s32.totalorder %s27, 1
          %s480 = scalar_select %p479, %s27, 1
          %s481 = smul.addr %s480, 4
          %s482 = smul.addr %s481, 4
          %s483 = scalar_lea.vmem %s2, %s482
        $region28: #{tpu_custom_call.1} parent=23 // pred_fallthru
          _
        // Predicated region
        $region29: #{tpu_custom_call.1} parent=23 // pred_check
          %p484 = pneg %p115
        $region30: #{tpu_custom_call.1} parent=23 // pred_check_branch
          %486 = sbr.rel (%p484) target = $region32
        $region31: #{tpu_custom_call.1} parent=23 // pred_region
          %p487 = scmp.lt.s32.totalorder %s27, 1
          %s488 = scalar_select %p487, %s27, 1
          %s489 = scalar_lea.vmem %s3, %s488
        $region32: #{tpu_custom_call.1} parent=23 // pred_fallthru
          _
        // Predicated region
        $region33: #{tpu_custom_call.1} parent=23 // pred_check
          %p490 = pneg %p141
        $region34: #{tpu_custom_call.1} parent=23 // pred_check_branch
          %492 = sbr.rel (%p490) target = $region36
        $region35: #{tpu_custom_call.1} parent=23 // pred_region
          %p493 = scmp.lt.s32.totalorder %s27, 1
          %s494 = scalar_select %p493, %s27, 1
          %s495 = smul.addr %s494, 4
          %s496 = smul.addr %s495, 4
          %s497 = scalar_lea.vmem %s4, %s496
        $region36: #{tpu_custom_call.1} parent=23 // pred_fallthru
          _
        // Predicated region
        $region37: #{tpu_custom_call.1} parent=23 // pred_check
          %p498 = pneg %p167
        $region38: #{tpu_custom_call.1} parent=23 // pred_check_branch
          %500 = sbr.rel (%p498) target = $region40
        $region39: #{tpu_custom_call.1} parent=23 // pred_region
          %p501 = scmp.lt.s32.totalorder %s27, 1
          %s502 = scalar_select %p501, %s27, 1
          %s503 = scalar_lea.vmem %s5, %s502
        $region40: #{tpu_custom_call.1} parent=23 // pred_fallthru
          _
        // Predicated region
        $region41: #{tpu_custom_call.1} parent=23 // pred_check
          %p504 = pneg %p193
        $region42: #{tpu_custom_call.1} parent=23 // pred_check_branch
          %506 = sbr.rel (%p504) target = $region44
        $region43: #{tpu_custom_call.1} parent=23 // pred_region
          %s507 = sand.u32 %s27, 1
          %s508 = scalar_lea.sflag [#allocation4], %s507
          %s509 = sand.u32 %s183, 1
          %s510 = scalar_lea.vmem [#allocation8], %s509
          %s512 = ssub.s32 16, 16
          %513 = vsyncadd %s508, %s512
          %s514 = smul.addr %s27, 16
          %s515 = scalar_lea.hbm %s6, %s514
          %s517 = sshll.u32 %s510, 4
          %s518 = int_to_ptr.vmem [resolvable:$true] %s517
          %520 = dma.hbm_to_vmem [thread:$0]  %s515, 16, %s518, %s508
        $region44: #{tpu_custom_call.1} parent=23 // pred_fallthru
          _
        // Predicated region
        $region45: #{tpu_custom_call.1} parent=23 // pred_check
          %p521 = pneg %p219
        $region46: #{tpu_custom_call.1} parent=23 // pred_check_branch
          %523 = sbr.rel (%p521) target = $region48
        $region47: #{tpu_custom_call.1} parent=23 // pred_region
          %s524 = sand.u32 %s27, 1
          %s525 = scalar_lea.sflag [#allocation4], %s524
          %s526 = sand.u32 %s209, 1
          %s527 = scalar_lea.vmem [#allocation9], %s526
          %s529 = ssub.s32 16, 16
          %530 = vsyncadd %s525, %s529
          %s531 = smul.addr %s27, 16
          %s532 = scalar_lea.hbm %s7, %s531
          %s534 = sshll.u32 %s527, 4
          %s535 = int_to_ptr.vmem [resolvable:$true] %s534
          %537 = dma.hbm_to_vmem [thread:$0]  %s532, 16, %s535, %s525
        $region48: #{tpu_custom_call.1} parent=23 // pred_fallthru
          _
        // Predicated region
        $region49: #{tpu_custom_call.1} parent=23 // pred_check
          %p538 = pneg %p245
        $region50: #{tpu_custom_call.1} parent=23 // pred_check_branch
          %540 = sbr.rel (%p538) target = $region52
        $region51: #{tpu_custom_call.1} parent=23 // pred_region
          %p541 = scmp.lt.s32.totalorder %s27, 1
          %s542 = scalar_select %p541, %s27, 1
          %s543 = smul.addr %s542, 4
          %s544 = smul.addr %s543, 4
          %s545 = scalar_lea.vmem %s8, %s544
        $region52: #{tpu_custom_call.1} parent=23 // pred_fallthru
          _
        // Predicated region
        $region53: #{tpu_custom_call.1} parent=23 // pred_check
          %p546 = pneg %p271
        $region54: #{tpu_custom_call.1} parent=23 // pred_check_branch
          %548 = sbr.rel (%p546) target = $region56
        $region55: #{tpu_custom_call.1} parent=23 // pred_region
          %s549 = sand.u32 %s27, 1
          %s550 = scalar_lea.sflag [#allocation4], %s549
          %s551 = sand.u32 %s261, 1
          %s552 = scalar_lea.vmem [#allocation10], %s551
          %s554 = ssub.s32 16, 16
          %555 = vsyncadd %s550, %s554
          %s556 = smul.addr %s27, 16
          %s557 = scalar_lea.hbm %s9, %s556
          %s559 = sshll.u32 %s552, 4
          %s560 = int_to_ptr.vmem [resolvable:$true] %s559
          %562 = dma.hbm_to_vmem [thread:$0]  %s557, 16, %s560, %s550
        $region56: #{tpu_custom_call.1} parent=23 // pred_fallthru
          _
        // Predicated region
        $region57: #{tpu_custom_call.1} parent=23 // pred_check
          %p563 = pneg %p297
        $region58: #{tpu_custom_call.1} parent=23 // pred_check_branch
          %565 = sbr.rel (%p563) target = $region60
        $region59: #{tpu_custom_call.1} parent=23 // pred_region
          %p566 = scmp.lt.s32.totalorder %s27, 1
          %s567 = scalar_select %p566, %s27, 1
          %s568 = smul.addr %s567, 8
          %s569 = smul.addr %s568, 4
          %s570 = scalar_lea.vmem %s10, %s569
        $region60: #{tpu_custom_call.1} parent=23 // pred_fallthru
          _
        // Predicated region
        $region61: #{tpu_custom_call.1} parent=23 // pred_check
          %p571 = pneg %p323
        $region62: #{tpu_custom_call.1} parent=23 // pred_check_branch
          %573 = sbr.rel (%p571) target = $region64
        $region63: #{tpu_custom_call.1} parent=23 // pred_region
          %p574 = scmp.lt.s32.totalorder %s27, 1
          %s575 = scalar_select %p574, %s27, 1
          %s576 = scalar_lea.vmem %s11, %s575
        $region64: #{tpu_custom_call.1} parent=23 // pred_fallthru
          _
        // Predicated region
        $region65: #{tpu_custom_call.1} parent=23 // pred_check
          %p577 = pneg %p349
        $region66: #{tpu_custom_call.1} parent=23 // pred_check_branch
          %579 = sbr.rel (%p577) target = $region68
        $region67: #{tpu_custom_call.1} parent=23 // pred_region
          %p580 = scmp.lt.s32.totalorder %s27, 1
          %s581 = scalar_select %p580, %s27, 1
          %s582 = scalar_lea.vmem %s12, %s581
        $region68: #{tpu_custom_call.1} parent=23 // pred_fallthru
          _
        // Predicated region
        $region69: #{tpu_custom_call.1} parent=23 // pred_check
          %p583 = pneg %p375
        $region70: #{tpu_custom_call.1} parent=23 // pred_check_branch
          %585 = sbr.rel (%p583) target = $region72
        $region71: #{tpu_custom_call.1} parent=23 // pred_region
          %p586 = scmp.lt.s32.totalorder %s27, 1
          %s587 = scalar_select %p586, %s27, 1
          %s588 = scalar_lea.vmem %s13, %s587
        $region72: #{tpu_custom_call.1} parent=23 // pred_fallthru
          _
      $region24: #{tpu_custom_call.1} parent=5 // pred_fallthru
        _
      %p589 = scmp.le.s32.totalorder 1, %s27
      %p590 = scmp.lt.s32.totalorder %s27, 3
      %p591 = pnand %p589, %p590
      %p592 = pneg %p591
      // Predicated region
      $region73: #{tpu_custom_call.1} parent=5 // pred_check
        _
      $region74: #{tpu_custom_call.1} parent=5 // pred_check_branch
        %594 = sbr.rel (%p591) target = $region76
      $region75: #{tpu_custom_call.1} parent=5 // pred_region
        %s595 = ssub.s32 %s27, 1
        // Predicated region
        $region77: #{tpu_custom_call.1} parent=75 // pred_check
          %p596 = pneg %p48
        $region78: #{tpu_custom_call.1} parent=75 // pred_check_branch
          %598 = sbr.rel (%p596) target = $region80
        $region79: #{tpu_custom_call.1} parent=75 // pred_region
          %599 = dma.done [#allocation4], 256
        $region80: #{tpu_custom_call.1} parent=75 // pred_fallthru
          _
        // Predicated region
        $region81: #{tpu_custom_call.1} parent=75 // pred_check
          %p600 = pneg %p69
        $region82: #{tpu_custom_call.1} parent=75 // pred_check_branch
          %602 = sbr.rel (%p600) target = $region84
        $region83: #{tpu_custom_call.1} parent=75 // pred_region
          %603 = dma.done [#allocation7], 128
        $region84: #{tpu_custom_call.1} parent=75 // pred_fallthru
          _
        %s604 = sand.u32 %s32, 1
        %s605 = scalar_lea.sflag [#allocation4], %s604
        %s606 = sand.u32 %s186, 1
        %s607 = scalar_lea.vmem [#allocation8], %s606
        // Predicated region
        $region85: #{tpu_custom_call.1} parent=75 // pred_check
          %p608 = pneg %p199
        $region86: #{tpu_custom_call.1} parent=75 // pred_check_branch
          %610 = sbr.rel (%p608) target = $region88
        $region87: #{tpu_custom_call.1} parent=75 // pred_region
          %611 = dma.done %s605, 16
        $region88: #{tpu_custom_call.1} parent=75 // pred_fallthru
          _
        %s612 = sand.u32 %s32, 1
        %s613 = scalar_lea.sflag [#allocation4], %s612
        %s614 = sand.u32 %s212, 1
        %s615 = scalar_lea.vmem [#allocation9], %s614
        // Predicated region
        $region89: #{tpu_custom_call.1} parent=75 // pred_check
          %p616 = pneg %p225
        $region90: #{tpu_custom_call.1} parent=75 // pred_check_branch
          %618 = sbr.rel (%p616) target = $region92
        $region91: #{tpu_custom_call.1} parent=75 // pred_region
          %619 = dma.done %s613, 16
        $region92: #{tpu_custom_call.1} parent=75 // pred_fallthru
          _
        %s620 = sand.u32 %s32, 1
        %s621 = scalar_lea.sflag [#allocation4], %s620
        %s622 = sand.u32 %s264, 1
        %s623 = scalar_lea.vmem [#allocation10], %s622
        // Predicated region
        $region93: #{tpu_custom_call.1} parent=75 // pred_check
          %p624 = pneg %p277
        $region94: #{tpu_custom_call.1} parent=75 // pred_check_branch
          %626 = sbr.rel (%p624) target = $region96
        $region95: #{tpu_custom_call.1} parent=75 // pred_region
          %627 = dma.done %s621, 16
        $region96: #{tpu_custom_call.1} parent=75 // pred_fallthru
          _
        %p628 = pneg %p48
        %p629 = pneg %p45
        %p630 = pneg %p69
        %p631 = pneg %p66
        %p632 = scmp.lt.s32.totalorder %s32, 1
        %s633 = scalar_select %p632, %s32, 1
        %s634 = smul.addr %s633, 4
        %s635 = smul.addr %s634, 4
        %s636 = scalar_lea.vmem %s2, %s635
        %p637 = pneg %p95
        %p638 = pneg %p92
        %p639 = scmp.lt.s32.totalorder %s32, 1
        %s640 = scalar_select %p639, %s32, 1
        %s641 = scalar_lea.vmem %s3, %s640
        %p642 = pneg %p121
        %p643 = pneg %p118
        %p644 = scmp.lt.s32.totalorder %s32, 1
        %s645 = scalar_select %p644, %s32, 1
        %s646 = smul.addr %s645, 4
        %s647 = smul.addr %s646, 4
        %s648 = scalar_lea.vmem %s4, %s647
        %p649 = pneg %p147
        %p650 = pneg %p144
        %p651 = scmp.lt.s32.totalorder %s32, 1
        %s652 = scalar_select %p651, %s32, 1
        %s653 = scalar_lea.vmem %s5, %s652
        %p654 = pneg %p173
        %p655 = pneg %p170
        %s656 = sand.u32 %s32, 1
        %s657 = scalar_lea.sflag [#allocation4], %s656
        %s658 = sand.u32 %s186, 1
        %s659 = scalar_lea.vmem [#allocation8], %s658
        %p660 = pneg %p199
        %p661 = pneg %p196
        %s662 = sand.u32 %s32, 1
        %s663 = scalar_lea.sflag [#allocation4], %s662
        %s664 = sand.u32 %s212, 1
        %s665 = scalar_lea.vmem [#allocation9], %s664
        %p666 = pneg %p225
        %p667 = pneg %p222
        %p668 = scmp.lt.s32.totalorder %s32, 1
        %s669 = scalar_select %p668, %s32, 1
        %s670 = smul.addr %s669, 4
        %s671 = smul.addr %s670, 4
        %s672 = scalar_lea.vmem %s8, %s671
        %p673 = pneg %p251
        %p674 = pneg %p248
        %s675 = sand.u32 %s32, 1
        %s676 = scalar_lea.sflag [#allocation4], %s675
        %s677 = sand.u32 %s264, 1
        %s678 = scalar_lea.vmem [#allocation10], %s677
        %p679 = pneg %p277
        %p680 = pneg %p274
        %p681 = scmp.lt.s32.totalorder %s32, 1
        %s682 = scalar_select %p681, %s32, 1
        %s683 = smul.addr %s682, 8
        %s684 = smul.addr %s683, 4
        %s685 = scalar_lea.vmem %s10, %s684
        %p686 = pneg %p303
        %p687 = pneg %p300
        %p688 = scmp.lt.s32.totalorder %s32, 1
        %s689 = scalar_select %p688, %s32, 1
        %s690 = scalar_lea.vmem %s11, %s689
        %p691 = pneg %p329
        %p692 = pneg %p326
        %p693 = scmp.lt.s32.totalorder %s32, 1
        %s694 = scalar_select %p693, %s32, 1
        %s695 = scalar_lea.vmem %s12, %s694
        %p696 = pneg %p355
        %p697 = pneg %p352
        %p698 = scmp.lt.s32.totalorder %s32, 1
        %s699 = scalar_select %p698, %s32, 1
        %s700 = scalar_lea.vmem %s13, %s699
        %p701 = pneg %p381
        %p702 = pneg %p378
        %p703 = pneg %p407
        %p704 = pneg %p404
        %s705 = sand.u32 %s394, 1
        %s706 = scalar_lea.sflag [#allocation5], %s705
        %s707 = sand.u32 %s394, 1
        %s708 = smul.addr %s707, 16
        %s709 = scalar_lea.vmem [#allocation11], %s708
        %p710 = pneg %p433
        %p711 = pneg %p430
        %p712 = scmp.lt.s32.totalorder %s32, 1
        %s713 = scalar_select %p712, %s32, 1
        %s714 = smul.addr %s713, 8
        %s715 = smul.addr %s714, 8
        %s716 = scalar_lea.vmem %s15, %s715
        %p717 = scmp.lt.s32.totalorder %s32, 1
        %s718 = scalar_select %p717, %s32, 1
        %s719 = smul.addr %s718, 4
        %s720 = smul.addr %s719, 4
        %s721 = scalar_lea.vmem %s2, %s720
        %p722 = scmp.lt.s32.totalorder %s32, 1
        %s723 = scalar_select %p722, %s32, 1
        %s724 = scalar_lea.vmem %s3, %s723
        %p725 = scmp.lt.s32.totalorder %s32, 1
        %s726 = scalar_select %p725, %s32, 1
        %s727 = smul.addr %s726, 4
        %s728 = smul.addr %s727, 4
        %s729 = scalar_lea.vmem %s4, %s728
        %p730 = scmp.lt.s32.totalorder %s32, 1
        %s731 = scalar_select %p730, %s32, 1
        %s732 = scalar_lea.vmem %s5, %s731
        %p733 = scmp.lt.s32.totalorder %s32, 1
        %s734 = scalar_select %p733, %s32, 1
        %s735 = smul.addr %s734, 4
        %s736 = smul.addr %s735, 4
        %s737 = scalar_lea.vmem %s8, %s736
        %p738 = scmp.lt.s32.totalorder %s32, 1
        %s739 = scalar_select %p738, %s32, 1
        %s740 = smul.addr %s739, 8
        %s741 = smul.addr %s740, 4
        %s742 = scalar_lea.vmem %s10, %s741
        %p743 = scmp.lt.s32.totalorder %s32, 1
        %s744 = scalar_select %p743, %s32, 1
        %s745 = scalar_lea.vmem %s11, %s744
        %p746 = scmp.lt.s32.totalorder %s32, 1
        %s747 = scalar_select %p746, %s32, 1
        %s748 = scalar_lea.vmem %s12, %s747
        %p749 = scmp.lt.s32.totalorder %s32, 1
        %s750 = scalar_select %p749, %s32, 1
        %s751 = scalar_lea.vmem %s13, %s750
        %p752 = scmp.lt.s32.totalorder %s32, 1
        %s753 = scalar_select %p752, %s32, 1
        %s754 = smul.addr %s753, 8
        %s755 = smul.addr %s754, 8
        %s756 = scalar_lea.vmem %s15, %s755
        %p758 = scmp.eq.s32.totalorder %s32, 0
        // Predicated region
        $region97: #{tpu_custom_call.1} parent=75 // pred_check
          %p759 = pneg %p758
        $region98: #{tpu_custom_call.1} parent=75 // pred_check_branch
          %761 = sbr.rel (%p759) target = $region100
        $region99: #{tpu_custom_call.1} parent=75 // pred_region
          %v762 = vld [vmem:[#allocation3] sm:$0xff]
          %v763 = vld [vmem:[#allocation3 + $0x8] sm:$0xff]
          %vm764 = vcmask 261120
          %765 = vst.msk [vmem:[#allocation2] sm:$0xff] %vm764, %v762
          %766 = vst.msk [vmem:[#allocation2 + $0x8] sm:$0xff] %vm764, %v763
        $region100: #{tpu_custom_call.1} parent=75 // pred_fallthru
          _
        %v767 = vld [vmem:[#allocation2] sm:$0xff]
        %v768 = vld [vmem:[#allocation2 + $0x8] sm:$0xff]
        %v769 = vpack.c.bf16 %v768, %v767
        %v770 = vld [vmem:[%s721] sm:$0xf]
        %v771 = vld [vmem:[%s721 + $0x4] sm:$0xf]
        %v772 = vld [vmem:[%s721 + $0x8] sm:$0xf]
        %v773 = vld [vmem:[%s721 + $0xc] sm:$0xf]
        %v774 = vld [vmem:[%s724] sm:$0x1]
        %v776 = vlaneseq
        %v777 = vshrl.u32 %v776, 7
        %v778 = vsub.s32 0, %v777
        %v779 = vrot.slane %v774, %v778
        %v785 = vunpack.c.l.b16 %v770
        %v786 = vunpack.c.l.b16 %v771
        %v787 = vunpack.c.l.b16 %v772
        %v788 = vunpack.c.l.b16 %v773
        %v789 = vpack.c.b16 %v786, %v785
        %v790 = vpack.c.b16 %v788, %v787
        %vm793 = vcmask 261120
        %v795 = vsel %vm793, %v769, 0
        %797 = vmatprep.subr.bf16.mxu0 0
        %798 = vmatpush1.bf16.msra.mxu0 %v789
        %799 = vmatprep.subr.bf16.mxu0 0
        %800 = vmatpush1.bf16.msra.mxu0 %v790
        %801 = vmatprep.subr.bf16.mxu0 0
        %802 = vmatpush1.bf16.msra.mxu0 0
        %803 = vmatprep.subr.bf16.mxu0 0
        %804 = vmatpush1.bf16.msra.mxu0 0
        %805 = vmatprep.subr.bf16.mxu0 0
        %806 = vmatpush1.bf16.msra.mxu0 0
        %807 = vmatprep.subr.bf16.mxu0 0
        %808 = vmatpush1.bf16.msra.mxu0 0
        %809 = vmatprep.subr.bf16.mxu0 0
        %810 = vmatpush1.bf16.msra.mxu0 0
        %811 = vmatprep.subr.bf16.mxu0 0
        %812 = vmatpush1.bf16.msra.mxu0 0
        %813 = vmatprep.subr.bf16.mxu0 0
        %814 = vmatpush1.bf16.msra.mxu0 0
        %815 = vmatprep.subr.bf16.mxu0 0
        %816 = vmatpush1.bf16.msra.mxu0 0
        %817 = vmatprep.subr.bf16.mxu0 0
        %818 = vmatpush1.bf16.msra.mxu0 0
        %819 = vmatprep.subr.bf16.mxu0 0
        %820 = vmatpush1.bf16.msra.mxu0 0
        %821 = vmatprep.subr.bf16.mxu0 0
        %822 = vmatpush1.bf16.msra.mxu0 0
        %823 = vmatprep.subr.bf16.mxu0 0
        %824 = vmatpush1.bf16.msra.mxu0 0
        %825 = vmatprep.subr.bf16.mxu0 0
        %826 = vmatpush1.bf16.msra.mxu0 0
        %827 = vmatprep.subr.bf16.mxu0 0
        %828 = vmatpush1.bf16.msra.mxu0 0
        %829 = vmatprep.mubr.bf16.mxu0 0
        %830 = vmatmul.mubr.bf16.gmra.mrb[0].mxu0 %v795
        %v831 = vpop.f32.mrb[0].mxu0
        %v832 = vadd.f32 %v779, %v831
        %v833 = vpop.f32.mrb[0].mxu0
        %v834 = vpop.f32.mrb[0].mxu0
        %v835 = vadd.f32 %v779, %v834
        %v836 = vpop.f32.mrb[0].mxu0
        %837 = vdwg.mxu0
        %v838 = vpack.c.bf16 %v835, %v832
        %v839 = vld [vmem:[#allocation6] sm:$0xff]
        %841 = vrot.lane.b32.xlu0 %v838, 96
        %v842 = vpop.permute.xlu0 %841
        %vm843 = vcmask 64512
        %v845 = vsel %vm843, %v838, 0
        %v848 = vsel %vm843, %v842, 0
        %850 = vmatprep.subr.bf16.mxu0 0
        %851 = vmatpush1.bf16.xpose.msra.mxu0 %v848
        %852 = vmatprep.subr.bf16.mxu0 0
        %853 = vmatpush1.bf16.xpose.msra.mxu0 0
        %854 = vmatprep.subr.bf16.mxu0 0
        %855 = vmatpush1.bf16.xpose.msra.mxu0 0
        %856 = vmatprep.subr.bf16.mxu0 0
        %857 = vmatpush1.bf16.xpose.msra.mxu0 0
        %858 = vmatprep.subr.bf16.mxu0 0
        %859 = vmatpush1.bf16.xpose.msra.mxu0 0
        %860 = vmatprep.subr.bf16.mxu0 0
        %861 = vmatpush1.bf16.xpose.msra.mxu0 0
        %862 = vmatprep.subr.bf16.mxu0 0
        %863 = vmatpush1.bf16.xpose.msra.mxu0 0
        %864 = vmatprep.subr.bf16.mxu0 0
        %865 = vmatpush1.bf16.xpose.msra.mxu0 0
        %866 = vmatprep.subr.bf16.mxu0 0
        %867 = vmatpush1.bf16.xpose.msra.mxu0 0
        %868 = vmatprep.subr.bf16.mxu0 0
        %869 = vmatpush1.bf16.xpose.msra.mxu0 0
        %870 = vmatprep.subr.bf16.mxu0 0
        %871 = vmatpush1.bf16.xpose.msra.mxu0 0
        %872 = vmatprep.subr.bf16.mxu0 0
        %873 = vmatpush1.bf16.xpose.msra.mxu0 0
        %874 = vmatprep.subr.bf16.mxu0 0
        %875 = vmatpush1.bf16.xpose.msra.mxu0 0
        %876 = vmatprep.subr.bf16.mxu0 0
        %877 = vmatpush1.bf16.xpose.msra.mxu0 0
        %878 = vmatprep.subr.bf16.mxu0 0
        %879 = vmatpush1.bf16.xpose.msra.mxu0 0
        %880 = vmatprep.subr.bf16.mxu0 0
        %881 = vmatpush1.bf16.xpose.msra.mxu0 0
        %882 = vmatprep.mubr.bf16.mxu0 0
        %883 = vmatmul.mubr.bf16.gmra.mrb[0].mxu0 %v845
        %v884 = vpop.f32.mrb[0].mxu0
        %v885 = vadd.f32 0.0, %v884
        %v886 = vpop.f32.mrb[0].mxu0
        %v887 = vpop.f32.mrb[0].mxu0
        %v888 = vpop.f32.mrb[0].mxu0
        %889 = vdwg.mxu0
        %v890 = vmul.f32 %v885, 0.35355338
        %v891 = vadd.f32 %v890, %v839
        %892 = vrot.lane.b32.xlu0 %v838, 120
        %v893 = vpop.permute.xlu0 %892
        %894 = vrot.lane.b32.xlu0 %v838, 88
        %v895 = vpop.permute.xlu0 %894
        %v897 = vsel %vm843, %v893, 0
        %v900 = vsel %vm843, %v895, 0
        %902 = vmatprep.subr.bf16.mxu0 0
        %903 = vmatpush1.bf16.xpose.msra.mxu0 %v900
        %904 = vmatprep.subr.bf16.mxu0 0
        %905 = vmatpush1.bf16.xpose.msra.mxu0 0
        %906 = vmatprep.subr.bf16.mxu0 0
        %907 = vmatpush1.bf16.xpose.msra.mxu0 0
        %908 = vmatprep.subr.bf16.mxu0 0
        %909 = vmatpush1.bf16.xpose.msra.mxu0 0
        %910 = vmatprep.subr.bf16.mxu0 0
        %911 = vmatpush1.bf16.xpose.msra.mxu0 0
        %912 = vmatprep.subr.bf16.mxu0 0
        %913 = vmatpush1.bf16.xpose.msra.mxu0 0
        %914 = vmatprep.subr.bf16.mxu0 0
        %915 = vmatpush1.bf16.xpose.msra.mxu0 0
        %916 = vmatprep.subr.bf16.mxu0 0
        %917 = vmatpush1.bf16.xpose.msra.mxu0 0
        %918 = vmatprep.subr.bf16.mxu0 0
        %919 = vmatpush1.bf16.xpose.msra.mxu0 0
        %920 = vmatprep.subr.bf16.mxu0 0
        %921 = vmatpush1.bf16.xpose.msra.mxu0 0
        %922 = vmatprep.subr.bf16.mxu0 0
        %923 = vmatpush1.bf16.xpose.msra.mxu0 0
        %924 = vmatprep.subr.bf16.mxu0 0
        %925 = vmatpush1.bf16.xpose.msra.mxu0 0
        %926 = vmatprep.subr.bf16.mxu0 0
        %927 = vmatpush1.bf16.xpose.msra.mxu0 0
        %928 = vmatprep.subr.bf16.mxu0 0
        %929 = vmatpush1.bf16.xpose.msra.mxu0 0
        %930 = vmatprep.subr.bf16.mxu0 0
        %931 = vmatpush1.bf16.xpose.msra.mxu0 0
        %932 = vmatprep.subr.bf16.mxu0 0
        %933 = vmatpush1.bf16.xpose.msra.mxu0 0
        %934 = vmatprep.mubr.bf16.mxu0 0
        %935 = vmatmul.mubr.bf16.gmra.mrb[0].mxu0 %v897
        %v936 = vpop.f32.mrb[0].mxu0
        %v937 = vadd.f32 0.0, %v936
        %v938 = vpop.f32.mrb[0].mxu0
        %v939 = vpop.f32.mrb[0].mxu0
        %v940 = vpop.f32.mrb[0].mxu0
        %941 = vdwg.mxu0
        %v942 = vmul.f32 %v937, 0.35355338
        %v943 = vadd.f32 %v942, %v839
        %944 = vrot.lane.b32.xlu0 %v838, 112
        %v945 = vpop.permute.xlu0 %944
        %946 = vrot.lane.b32.xlu0 %v838, 80
        %v947 = vpop.permute.xlu0 %946
        %v949 = vsel %vm843, %v945, 0
        %v952 = vsel %vm843, %v947, 0
        %954 = vmatprep.subr.bf16.mxu0 0
        %955 = vmatpush1.bf16.xpose.msra.mxu0 %v952
        %956 = vmatprep.subr.bf16.mxu0 0
        %957 = vmatpush1.bf16.xpose.msra.mxu0 0
        %958 = vmatprep.subr.bf16.mxu0 0
        %959 = vmatpush1.bf16.xpose.msra.mxu0 0
        %960 = vmatprep.subr.bf16.mxu0 0
        %961 = vmatpush1.bf16.xpose.msra.mxu0 0
        %962 = vmatprep.subr.bf16.mxu0 0
        %963 = vmatpush1.bf16.xpose.msra.mxu0 0
        %964 = vmatprep.subr.bf16.mxu0 0
        %965 = vmatpush1.bf16.xpose.msra.mxu0 0
        %966 = vmatprep.subr.bf16.mxu0 0
        %967 = vmatpush1.bf16.xpose.msra.mxu0 0
        %968 = vmatprep.subr.bf16.mxu0 0
        %969 = vmatpush1.bf16.xpose.msra.mxu0 0
        %970 = vmatprep.subr.bf16.mxu0 0
        %971 = vmatpush1.bf16.xpose.msra.mxu0 0
        %972 = vmatprep.subr.bf16.mxu0 0
        %973 = vmatpush1.bf16.xpose.msra.mxu0 0
        %974 = vmatprep.subr.bf16.mxu0 0
        %975 = vmatpush1.bf16.xpose.msra.mxu0 0
        %976 = vmatprep.subr.bf16.mxu0 0
        %977 = vmatpush1.bf16.xpose.msra.mxu0 0
        %978 = vmatprep.subr.bf16.mxu0 0
        %979 = vmatpush1.bf16.xpose.msra.mxu0 0
        %980 = vmatprep.subr.bf16.mxu0 0
        %981 = vmatpush1.bf16.xpose.msra.mxu0 0
        %982 = vmatprep.subr.bf16.mxu0 0
        %983 = vmatpush1.bf16.xpose.msra.mxu0 0
        %984 = vmatprep.subr.bf16.mxu0 0
        %985 = vmatpush1.bf16.xpose.msra.mxu0 0
        %986 = vmatprep.mubr.bf16.mxu0 0
        %987 = vmatmul.mubr.bf16.gmra.mrb[0].mxu0 %v949
        %v988 = vpop.f32.mrb[0].mxu0
        %v989 = vadd.f32 0.0, %v988
        %v990 = vpop.f32.mrb[0].mxu0
        %v991 = vpop.f32.mrb[0].mxu0
        %v992 = vpop.f32.mrb[0].mxu0
        %993 = vdwg.mxu0
        %v994 = vmul.f32 %v989, 0.35355338
        %v995 = vadd.f32 %v994, %v839
        %996 = vrot.lane.b32.xlu0 %v838, 104
        %v997 = vpop.permute.xlu0 %996
        %998 = vrot.lane.b32.xlu0 %v838, 72
        %v999 = vpop.permute.xlu0 %998
        %v1001 = vsel %vm843, %v997, 0
        %v1004 = vsel %vm843, %v999, 0
        %1006 = vmatprep.subr.bf16.mxu0 0
        %1007 = vmatpush1.bf16.xpose.msra.mxu0 %v1004
        %1008 = vmatprep.subr.bf16.mxu0 0
        %1009 = vmatpush1.bf16.xpose.msra.mxu0 0
        %1010 = vmatprep.subr.bf16.mxu0 0
        %1011 = vmatpush1.bf16.xpose.msra.mxu0 0
        %1012 = vmatprep.subr.bf16.mxu0 0
        %1013 = vmatpush1.bf16.xpose.msra.mxu0 0
        %1014 = vmatprep.subr.bf16.mxu0 0
        %1015 = vmatpush1.bf16.xpose.msra.mxu0 0
        %1016 = vmatprep.subr.bf16.mxu0 0
        %1017 = vmatpush1.bf16.xpose.msra.mxu0 0
        %1018 = vmatprep.subr.bf16.mxu0 0
        %1019 = vmatpush1.bf16.xpose.msra.mxu0 0
        %1020 = vmatprep.subr.bf16.mxu0 0
        %1021 = vmatpush1.bf16.xpose.msra.mxu0 0
        %1022 = vmatprep.subr.bf16.mxu0 0
        %1023 = vmatpush1.bf16.xpose.msra.mxu0 0
        %1024 = vmatprep.subr.bf16.mxu0 0
        %1025 = vmatpush1.bf16.xpose.msra.mxu0 0
        %1026 = vmatprep.subr.bf16.mxu0 0
        %1027 = vmatpush1.bf16.xpose.msra.mxu0 0
        %1028 = vmatprep.subr.bf16.mxu0 0
        %1029 = vmatpush1.bf16.xpose.msra.mxu0 0
        %1030 = vmatprep.subr.bf16.mxu0 0
        %1031 = vmatpush1.bf16.xpose.msra.mxu0 0
        %1032 = vmatprep.subr.bf16.mxu0 0
        %1033 = vmatpush1.bf16.xpose.msra.mxu0 0
        %1034 = vmatprep.subr.bf16.mxu0 0
        %1035 = vmatpush1.bf16.xpose.msra.mxu0 0
        %1036 = vmatprep.subr.bf16.mxu0 0
        %1037 = vmatpush1.bf16.xpose.msra.mxu0 0
        %1038 = vmatprep.mubr.bf16.mxu0 0
        %1039 = vmatmul.mubr.bf16.gmra.mrb[0].mxu0 %v1001
        %v1040 = vpop.f32.mrb[0].mxu0
        %v1041 = vadd.f32 0.0, %v1040
        %v1042 = vpop.f32.mrb[0].mxu0
        %v1043 = vpop.f32.mrb[0].mxu0
        %v1044 = vpop.f32.mrb[0].mxu0
        %1045 = vdwg.mxu0
        %v1046 = vmul.f32 %v1041, 0.35355338
        %v1047 = vadd.f32 %v1046, %v839
        %v1048 = vrot.slane %v838, 4
        %1049 = vrot.lane.b32.xlu0 %v1048, 96
        %v1050 = vpop.permute.xlu0 %1049
        %v1052 = vsel %vm843, %v1048, 0
        %v1055 = vsel %vm843, %v1050, 0
        %1057 = vmatprep.subr.bf16.mxu0 0
        %1058 = vmatpush1.bf16.xpose.msra.mxu0 %v1055
        %1059 = vmatprep.subr.bf16.mxu0 0
        %1060 = vmatpush1.bf16.xpose.msra.mxu0 0
        %1061 = vmatprep.subr.bf16.mxu0 0
        %1062 = vmatpush1.bf16.xpose.msra.mxu0 0
        %1063 = vmatprep.subr.bf16.mxu0 0
        %1064 = vmatpush1.bf16.xpose.msra.mxu0 0
        %1065 = vmatprep.subr.bf16.mxu0 0
        %1066 = vmatpush1.bf16.xpose.msra.mxu0 0
        %1067 = vmatprep.subr.bf16.mxu0 0
        %1068 = vmatpush1.bf16.xpose.msra.mxu0 0
        %1069 = vmatprep.subr.bf16.mxu0 0
        %1070 = vmatpush1.bf16.xpose.msra.mxu0 0
        %1071 = vmatprep.subr.bf16.mxu0 0
        %1072 = vmatpush1.bf16.xpose.msra.mxu0 0
        %1073 = vmatprep.subr.bf16.mxu0 0
        %1074 = vmatpush1.bf16.xpose.msra.mxu0 0
        %1075 = vmatprep.subr.bf16.mxu0 0
        %1076 = vmatpush1.bf16.xpose.msra.mxu0 0
        %1077 = vmatprep.subr.bf16.mxu0 0
        %1078 = vmatpush1.bf16.xpose.msra.mxu0 0
        %1079 = vmatprep.subr.bf16.mxu0 0
        %1080 = vmatpush1.bf16.xpose.msra.mxu0 0
        %1081 = vmatprep.subr.bf16.mxu0 0
        %1082 = vmatpush1.bf16.xpose.msra.mxu0 0
        %1083 = vmatprep.subr.bf16.mxu0 0
        %1084 = vmatpush1.bf16.xpose.msra.mxu0 0
        %1085 = vmatprep.subr.bf16.mxu0 0
        %1086 = vmatpush1.bf16.xpose.msra.mxu0 0
        %1087 = vmatprep.subr.bf16.mxu0 0
        %1088 = vmatpush1.bf16.xpose.msra.mxu0 0
        %1089 = vmatprep.mubr.bf16.mxu0 0
        %1090 = vmatmul.mubr.bf16.gmra.mrb[0].mxu0 %v1052
        %v1091 = vpop.f32.mrb[0].mxu0
        %v1092 = vadd.f32 0.0, %v1091
        %v1093 = vpop.f32.mrb[0].mxu0
        %v1094 = vpop.f32.mrb[0].mxu0
        %v1095 = vpop.f32.mrb[0].mxu0
        %1096 = vdwg.mxu0
        %v1097 = vmul.f32 %v1092, 0.35355338
        %v1098 = vadd.f32 %v1097, %v839
        %1099 = vrot.lane.b32.xlu0 %v1048, 120
        %v1100 = vpop.permute.xlu0 %1099
        %1101 = vrot.lane.b32.xlu0 %v1048, 88
        %v1102 = vpop.permute.xlu0 %1101
        %v1104 = vsel %vm843, %v1100, 0
        %v1107 = vsel %vm843, %v1102, 0
        %1109 = vmatprep.subr.bf16.mxu0 0
        %1110 = vmatpush1.bf16.xpose.msra.mxu0 %v1107
        %1111 = vmatprep.subr.bf16.mxu0 0
        %1112 = vmatpush1.bf16.xpose.msra.mxu0 0
        %1113 = vmatprep.subr.bf16.mxu0 0
        %1114 = vmatpush1.bf16.xpose.msra.mxu0 0
        %1115 = vmatprep.subr.bf16.mxu0 0
        %1116 = vmatpush1.bf16.xpose.msra.mxu0 0
        %1117 = vmatprep.subr.bf16.mxu0 0
        %1118 = vmatpush1.bf16.xpose.msra.mxu0 0
        %1119 = vmatprep.subr.bf16.mxu0 0
        %1120 = vmatpush1.bf16.xpose.msra.mxu0 0
        %1121 = vmatprep.subr.bf16.mxu0 0
        %1122 = vmatpush1.bf16.xpose.msra.mxu0 0
        %1123 = vmatprep.subr.bf16.mxu0 0
        %1124 = vmatpush1.bf16.xpose.msra.mxu0 0
        %1125 = vmatprep.subr.bf16.mxu0 0
        %1126 = vmatpush1.bf16.xpose.msra.mxu0 0
        %1127 = vmatprep.subr.bf16.mxu0 0
        %1128 = vmatpush1.bf16.xpose.msra.mxu0 0
        %1129 = vmatprep.subr.bf16.mxu0 0
        %1130 = vmatpush1.bf16.xpose.msra.mxu0 0
        %1131 = vmatprep.subr.bf16.mxu0 0
        %1132 = vmatpush1.bf16.xpose.msra.mxu0 0
        %1133 = vmatprep.subr.bf16.mxu0 0
        %1134 = vmatpush1.bf16.xpose.msra.mxu0 0
        %1135 = vmatprep.subr.bf16.mxu0 0
        %1136 = vmatpush1.bf16.xpose.msra.mxu0 0
        %1137 = vmatprep.subr.bf16.mxu0 0
        %1138 = vmatpush1.bf16.xpose.msra.mxu0 0
        %1139 = vmatprep.subr.bf16.mxu0 0
        %1140 = vmatpush1.bf16.xpose.msra.mxu0 0
        %1141 = vmatprep.mubr.bf16.mxu0 0
        %1142 = vmatmul.mubr.bf16.gmra.mrb[0].mxu0 %v1104
        %v1143 = vpop.f32.mrb[0].mxu0
        %v1144 = vadd.f32 0.0, %v1143
        %v1145 = vpop.f32.mrb[0].mxu0
        %v1146 = vpop.f32.mrb[0].mxu0
        %v1147 = vpop.f32.mrb[0].mxu0
        %1148 = vdwg.mxu0
        %v1149 = vmul.f32 %v1144, 0.35355338
        %v1150 = vadd.f32 %v1149, %v839
        %1151 = vrot.lane.b32.xlu0 %v1048, 112
        %v1152 = vpop.permute.xlu0 %1151
        %1153 = vrot.lane.b32.xlu0 %v1048, 80
        %v1154 = vpop.permute.xlu0 %1153
        %v1156 = vsel %vm843, %v1152, 0
        %v1159 = vsel %vm843, %v1154, 0
        %1161 = vmatprep.subr.bf16.mxu0 0
        %1162 = vmatpush1.bf16.xpose.msra.mxu0 %v1159
        %1163 = vmatprep.subr.bf16.mxu0 0
        %1164 = vmatpush1.bf16.xpose.msra.mxu0 0
        %1165 = vmatprep.subr.bf16.mxu0 0
        %1166 = vmatpush1.bf16.xpose.msra.mxu0 0
        %1167 = vmatprep.subr.bf16.mxu0 0
        %1168 = vmatpush1.bf16.xpose.msra.mxu0 0
        %1169 = vmatprep.subr.bf16.mxu0 0
        %1170 = vmatpush1.bf16.xpose.msra.mxu0 0
        %1171 = vmatprep.subr.bf16.mxu0 0
        %1172 = vmatpush1.bf16.xpose.msra.mxu0 0
        %1173 = vmatprep.subr.bf16.mxu0 0
        %1174 = vmatpush1.bf16.xpose.msra.mxu0 0
        %1175 = vmatprep.subr.bf16.mxu0 0
        %1176 = vmatpush1.bf16.xpose.msra.mxu0 0
        %1177 = vmatprep.subr.bf16.mxu0 0
        %1178 = vmatpush1.bf16.xpose.msra.mxu0 0
        %1179 = vmatprep.subr.bf16.mxu0 0
        %1180 = vmatpush1.bf16.xpose.msra.mxu0 0
        %1181 = vmatprep.subr.bf16.mxu0 0
        %1182 = vmatpush1.bf16.xpose.msra.mxu0 0
        %1183 = vmatprep.subr.bf16.mxu0 0
        %1184 = vmatpush1.bf16.xpose.msra.mxu0 0
        %1185 = vmatprep.subr.bf16.mxu0 0
        %1186 = vmatpush1.bf16.xpose.msra.mxu0 0
        %1187 = vmatprep.subr.bf16.mxu0 0
        %1188 = vmatpush1.bf16.xpose.msra.mxu0 0
        %1189 = vmatprep.subr.bf16.mxu0 0
        %1190 = vmatpush1.bf16.xpose.msra.mxu0 0
        %1191 = vmatprep.subr.bf16.mxu0 0
        %1192 = vmatpush1.bf16.xpose.msra.mxu0 0
        %1193 = vmatprep.mubr.bf16.mxu0 0
        %1194 = vmatmul.mubr.bf16.gmra.mrb[0].mxu0 %v1156
        %v1195 = vpop.f32.mrb[0].mxu0
        %v1196 = vadd.f32 0.0, %v1195
        %v1197 = vpop.f32.mrb[0].mxu0
        %v1198 = vpop.f32.mrb[0].mxu0
        %v1199 = vpop.f32.mrb[0].mxu0
        %1200 = vdwg.mxu0
        %v1201 = vmul.f32 %v1196, 0.35355338
        %v1202 = vadd.f32 %v1201, %v839
        %1203 = vrot.lane.b32.xlu0 %v1048, 104
        %v1204 = vpop.permute.xlu0 %1203
        %1205 = vrot.lane.b32.xlu0 %v1048, 72
        %v1206 = vpop.permute.xlu0 %1205
        %v1208 = vsel %vm843, %v1204, 0
        %v1211 = vsel %vm843, %v1206, 0
        %1213 = vmatprep.subr.bf16.mxu0 0
        %1214 = vmatpush1.bf16.xpose.msra.mxu0 %v1211
        %1215 = vmatprep.subr.bf16.mxu0 0
        %1216 = vmatpush1.bf16.xpose.msra.mxu0 0
        %1217 = vmatprep.subr.bf16.mxu0 0
        %1218 = vmatpush1.bf16.xpose.msra.mxu0 0
        %1219 = vmatprep.subr.bf16.mxu0 0
        %1220 = vmatpush1.bf16.xpose.msra.mxu0 0
        %1221 = vmatprep.subr.bf16.mxu0 0
        %1222 = vmatpush1.bf16.xpose.msra.mxu0 0
        %1223 = vmatprep.subr.bf16.mxu0 0
        %1224 = vmatpush1.bf16.xpose.msra.mxu0 0
        %1225 = vmatprep.subr.bf16.mxu0 0
        %1226 = vmatpush1.bf16.xpose.msra.mxu0 0
        %1227 = vmatprep.subr.bf16.mxu0 0
        %1228 = vmatpush1.bf16.xpose.msra.mxu0 0
        %1229 = vmatprep.subr.bf16.mxu0 0
        %1230 = vmatpush1.bf16.xpose.msra.mxu0 0
        %1231 = vmatprep.subr.bf16.mxu0 0
        %1232 = vmatpush1.bf16.xpose.msra.mxu0 0
        %1233 = vmatprep.subr.bf16.mxu0 0
        %1234 = vmatpush1.bf16.xpose.msra.mxu0 0
        %1235 = vmatprep.subr.bf16.mxu0 0
        %1236 = vmatpush1.bf16.xpose.msra.mxu0 0
        %1237 = vmatprep.subr.bf16.mxu0 0
        %1238 = vmatpush1.bf16.xpose.msra.mxu0 0
        %1239 = vmatprep.subr.bf16.mxu0 0
        %1240 = vmatpush1.bf16.xpose.msra.mxu0 0
        %1241 = vmatprep.subr.bf16.mxu0 0
        %1242 = vmatpush1.bf16.xpose.msra.mxu0 0
        %1243 = vmatprep.subr.bf16.mxu0 0
        %1244 = vmatpush1.bf16.xpose.msra.mxu0 0
        %1245 = vmatprep.mubr.bf16.mxu0 0
        %1246 = vmatmul.mubr.bf16.gmra.mrb[0].mxu0 %v1208
        %v1247 = vpop.f32.mrb[0].mxu0
        %v1248 = vadd.f32 0.0, %v1247
        %v1249 = vpop.f32.mrb[0].mxu0
        %v1250 = vpop.f32.mrb[0].mxu0
        %v1251 = vpop.f32.mrb[0].mxu0
        %1252 = vdwg.mxu0
        %v1253 = vmul.f32 %v1248, 0.35355338
        %v1254 = vadd.f32 %v1253, %v839
        %v1255 = vsel %vm843, %v891, -inf
        %1256 = vmax.xlane.f32.xlu0 %v1255
        %v1257 = vpop.xlane.xlu0 %1256
        %v1258 = vsel %vm843, %v943, -inf
        %1259 = vmax.xlane.f32.xlu0 %v1258
        %v1260 = vpop.xlane.xlu0 %1259
        %v1261 = vsel %vm843, %v995, -inf
        %1262 = vmax.xlane.f32.xlu0 %v1261
        %v1263 = vpop.xlane.xlu0 %1262
        %v1264 = vsel %vm843, %v1047, -inf
        %1265 = vmax.xlane.f32.xlu0 %v1264
        %v1266 = vpop.xlane.xlu0 %1265
        %v1267 = vsel %vm843, %v1098, -inf
        %1268 = vmax.xlane.f32.xlu0 %v1267
        %v1269 = vpop.xlane.xlu0 %1268
        %v1270 = vsel %vm843, %v1150, -inf
        %1271 = vmax.xlane.f32.xlu0 %v1270
        %v1272 = vpop.xlane.xlu0 %1271
        %v1273 = vsel %vm843, %v1202, -inf
        %1274 = vmax.xlane.f32.xlu0 %v1273
        %v1275 = vpop.xlane.xlu0 %1274
        %v1276 = vsel %vm843, %v1254, -inf
        %1277 = vmax.xlane.f32.xlu0 %v1276
        %v1278 = vpop.xlane.xlu0 %1277
        %v1279 = vsub.f32 %v891, %v1257
        %v1280 = vsub.f32 %v943, %v1260
        %v1281 = vsub.f32 %v995, %v1263
        %v1282 = vsub.f32 %v1047, %v1266
        %v1283 = vsub.f32 %v1098, %v1269
        %v1284 = vsub.f32 %v1150, %v1272
        %v1285 = vsub.f32 %v1202, %v1275
        %v1286 = vsub.f32 %v1254, %v1278
        %v1287 = vmul.f32 %v1279, 1.442695
        %v1288 = vpow.pop %v1287
        %v1289 = vmul.f32 %v1280, 1.442695
        %v1290 = vpow.pop %v1289
        %v1291 = vmul.f32 %v1281, 1.442695
        %v1292 = vpow.pop %v1291
        %v1293 = vmul.f32 %v1282, 1.442695
        %v1294 = vpow.pop %v1293
        %v1295 = vmul.f32 %v1283, 1.442695
        %v1296 = vpow.pop %v1295
        %v1297 = vmul.f32 %v1284, 1.442695
        %v1298 = vpow.pop %v1297
        %v1299 = vmul.f32 %v1285, 1.442695
        %v1300 = vpow.pop %v1299
        %v1301 = vmul.f32 %v1286, 1.442695
        %v1302 = vpow.pop %v1301
        %v1303 = vsel %vm843, %v1288, 0.0
        %1304 = vadd.xlane.f32.xlu0 %v1303
        %v1305 = vpop.xlane.xlu0 %1304
        %v1306 = vsel %vm843, %v1290, 0.0
        %1307 = vadd.xlane.f32.xlu0 %v1306
        %v1308 = vpop.xlane.xlu0 %1307
        %v1309 = vsel %vm843, %v1292, 0.0
        %1310 = vadd.xlane.f32.xlu0 %v1309
        %v1311 = vpop.xlane.xlu0 %1310
        %v1312 = vsel %vm843, %v1294, 0.0
        %1313 = vadd.xlane.f32.xlu0 %v1312
        %v1314 = vpop.xlane.xlu0 %1313
        %v1315 = vsel %vm843, %v1296, 0.0
        %1316 = vadd.xlane.f32.xlu0 %v1315
        %v1317 = vpop.xlane.xlu0 %1316
        %v1318 = vsel %vm843, %v1298, 0.0
        %1319 = vadd.xlane.f32.xlu0 %v1318
        %v1320 = vpop.xlane.xlu0 %1319
        %v1321 = vsel %vm843, %v1300, 0.0
        %1322 = vadd.xlane.f32.xlu0 %v1321
        %v1323 = vpop.xlane.xlu0 %1322
        %v1324 = vsel %vm843, %v1302, 0.0
        %1325 = vadd.xlane.f32.xlu0 %v1324
        %v1326 = vpop.xlane.xlu0 %1325
        %v1327 = vrcp.pop %v1305
        %v1328 = vrcp.pop %v1308
        %v1329 = vrcp.pop %v1311
        %v1330 = vrcp.pop %v1314
        %v1331 = vrcp.pop %v1317
        %v1332 = vrcp.pop %v1320
        %v1333 = vrcp.pop %v1323
        %v1334 = vrcp.pop %v1326
        %v1335 = vmul.f32 %v1288, %v1327
        %v1336 = vmul.f32 %v1290, %v1328
        %v1337 = vmul.f32 %v1292, %v1329
        %v1338 = vmul.f32 %v1294, %v1330
        %v1339 = vmul.f32 %v1296, %v1331
        %v1340 = vmul.f32 %v1298, %v1332
        %v1341 = vmul.f32 %v1300, %v1333
        %v1342 = vmul.f32 %v1302, %v1334
        %1343 = vst.msk [vmem:[%s756] sm:$0xff] %vm843, %v1335
        %1344 = vst.msk [vmem:[%s756 + $0x8] sm:$0xff] %vm843, %v1336
        %1345 = vst.msk [vmem:[%s756 + $0x10] sm:$0xff] %vm843, %v1337
        %1346 = vst.msk [vmem:[%s756 + $0x18] sm:$0xff] %vm843, %v1338
        %1347 = vst.msk [vmem:[%s756 + $0x20] sm:$0xff] %vm843, %v1339
        %1348 = vst.msk [vmem:[%s756 + $0x28] sm:$0xff] %vm843, %v1340
        %1349 = vst.msk [vmem:[%s756 + $0x30] sm:$0xff] %vm843, %v1341
        %1350 = vst.msk [vmem:[%s756 + $0x38] sm:$0xff] %vm843, %v1342
        %v1351 = vpack.c.bf16 %v1336, %v1335
        %v1352 = vpack.c.bf16 %v1338, %v1337
        %v1353 = vpack.c.bf16 %v1340, %v1339
        %v1354 = vpack.c.bf16 %v1342, %v1341
        %1355 = vrot.lane.b32.xlu0 %v838, 64
        %v1356 = vpop.permute.xlu0 %1355
        %v1358 = vsel %vm843, %v1351, 0
        %vm1360 = vcmask 1043456
        %v1362 = vsel %vm1360, %v1356, 0
        %1364 = vmatprep.subr.bf16.mxu0 0
        %1365 = vmatpush1.bf16.msra.mxu0 %v1362
        %1366 = vmatprep.subr.bf16.mxu0 0
        %1367 = vmatpush1.bf16.msra.mxu0 0
        %1368 = vmatprep.subr.bf16.mxu0 0
        %1369 = vmatpush1.bf16.msra.mxu0 0
        %1370 = vmatprep.subr.bf16.mxu0 0
        %1371 = vmatpush1.bf16.msra.mxu0 0
        %1372 = vmatprep.subr.bf16.mxu0 0
        %1373 = vmatpush1.bf16.msra.mxu0 0
        %1374 = vmatprep.subr.bf16.mxu0 0
        %1375 = vmatpush1.bf16.msra.mxu0 0
        %1376 = vmatprep.subr.bf16.mxu0 0
        %1377 = vmatpush1.bf16.msra.mxu0 0
        %1378 = vmatprep.subr.bf16.mxu0 0
        %1379 = vmatpush1.bf16.msra.mxu0 0
        %1380 = vmatprep.subr.bf16.mxu0 0
        %1381 = vmatpush1.bf16.msra.mxu0 0
        %1382 = vmatprep.subr.bf16.mxu0 0
        %1383 = vmatpush1.bf16.msra.mxu0 0
        %1384 = vmatprep.subr.bf16.mxu0 0
        %1385 = vmatpush1.bf16.msra.mxu0 0
        %1386 = vmatprep.subr.bf16.mxu0 0
        %1387 = vmatpush1.bf16.msra.mxu0 0
        %1388 = vmatprep.subr.bf16.mxu0 0
        %1389 = vmatpush1.bf16.msra.mxu0 0
        %1390 = vmatprep.subr.bf16.mxu0 0
        %1391 = vmatpush1.bf16.msra.mxu0 0
        %1392 = vmatprep.subr.bf16.mxu0 0
        %1393 = vmatpush1.bf16.msra.mxu0 0
        %1394 = vmatprep.subr.bf16.mxu0 0
        %1395 = vmatpush1.bf16.msra.mxu0 0
        %1396 = vmatprep.mubr.bf16.mxu0 0
        %1397 = vmatmul.mubr.bf16.gmra.mrb[0].mxu0 %v1358
        %v1398 = vpop.f32.mrb[0].mxu0
        %v1399 = vadd.f32 0.0, %v1398
        %v1400 = vpop.f32.mrb[0].mxu0
        %v1401 = vpop.f32.mrb[0].mxu0
        %v1402 = vpop.f32.mrb[0].mxu0
        %1403 = vdwg.mxu0
        %v1405 = vrot.slane %v1351, 4
        %1406 = vrot.lane.b32.xlu0 %v838, 56
        %v1407 = vpop.permute.xlu0 %1406
        %v1409 = vsel %vm843, %v1405, 0
        %v1412 = vsel %vm1360, %v1407, 0
        %1414 = vmatprep.subr.bf16.mxu0 0
        %1415 = vmatpush1.bf16.msra.mxu0 %v1412
        %1416 = vmatprep.subr.bf16.mxu0 0
        %1417 = vmatpush1.bf16.msra.mxu0 0
        %1418 = vmatprep.subr.bf16.mxu0 0
        %1419 = vmatpush1.bf16.msra.mxu0 0
        %1420 = vmatprep.subr.bf16.mxu0 0
        %1421 = vmatpush1.bf16.msra.mxu0 0
        %1422 = vmatprep.subr.bf16.mxu0 0
        %1423 = vmatpush1.bf16.msra.mxu0 0
        %1424 = vmatprep.subr.bf16.mxu0 0
        %1425 = vmatpush1.bf16.msra.mxu0 0
        %1426 = vmatprep.subr.bf16.mxu0 0
        %1427 = vmatpush1.bf16.msra.mxu0 0
        %1428 = vmatprep.subr.bf16.mxu0 0
        %1429 = vmatpush1.bf16.msra.mxu0 0
        %1430 = vmatprep.subr.bf16.mxu0 0
        %1431 = vmatpush1.bf16.msra.mxu0 0
        %1432 = vmatprep.subr.bf16.mxu0 0
        %1433 = vmatpush1.bf16.msra.mxu0 0
        %1434 = vmatprep.subr.bf16.mxu0 0
        %1435 = vmatpush1.bf16.msra.mxu0 0
        %1436 = vmatprep.subr.bf16.mxu0 0
        %1437 = vmatpush1.bf16.msra.mxu0 0
        %1438 = vmatprep.subr.bf16.mxu0 0
        %1439 = vmatpush1.bf16.msra.mxu0 0
        %1440 = vmatprep.subr.bf16.mxu0 0
        %1441 = vmatpush1.bf16.msra.mxu0 0
        %1442 = vmatprep.subr.bf16.mxu0 0
        %1443 = vmatpush1.bf16.msra.mxu0 0
        %1444 = vmatprep.subr.bf16.mxu0 0
        %1445 = vmatpush1.bf16.msra.mxu0 0
        %1446 = vmatprep.mubr.bf16.mxu0 0
        %1447 = vmatmul.mubr.bf16.gmra.mrb[0].mxu0 %v1409
        %v1448 = vpop.f32.mrb[0].mxu0
        %v1449 = vadd.f32 0.0, %v1448
        %v1450 = vpop.f32.mrb[0].mxu0
        %v1451 = vpop.f32.mrb[0].mxu0
        %v1452 = vpop.f32.mrb[0].mxu0
        %1453 = vdwg.mxu0
        %1454 = vrot.lane.b32.xlu0 %v838, 48
        %v1455 = vpop.permute.xlu0 %1454
        %v1457 = vsel %vm843, %v1352, 0
        %v1460 = vsel %vm1360, %v1455, 0
        %1462 = vmatprep.subr.bf16.mxu0 0
        %1463 = vmatpush1.bf16.msra.mxu0 %v1460
        %1464 = vmatprep.subr.bf16.mxu0 0
        %1465 = vmatpush1.bf16.msra.mxu0 0
        %1466 = vmatprep.subr.bf16.mxu0 0
        %1467 = vmatpush1.bf16.msra.mxu0 0
        %1468 = vmatprep.subr.bf16.mxu0 0
        %1469 = vmatpush1.bf16.msra.mxu0 0
        %1470 = vmatprep.subr.bf16.mxu0 0
        %1471 = vmatpush1.bf16.msra.mxu0 0
        %1472 = vmatprep.subr.bf16.mxu0 0
        %1473 = vmatpush1.bf16.msra.mxu0 0
        %1474 = vmatprep.subr.bf16.mxu0 0
        %1475 = vmatpush1.bf16.msra.mxu0 0
        %1476 = vmatprep.subr.bf16.mxu0 0
        %1477 = vmatpush1.bf16.msra.mxu0 0
        %1478 = vmatprep.subr.bf16.mxu0 0
        %1479 = vmatpush1.bf16.msra.mxu0 0
        %1480 = vmatprep.subr.bf16.mxu0 0
        %1481 = vmatpush1.bf16.msra.mxu0 0
        %1482 = vmatprep.subr.bf16.mxu0 0
        %1483 = vmatpush1.bf16.msra.mxu0 0
        %1484 = vmatprep.subr.bf16.mxu0 0
        %1485 = vmatpush1.bf16.msra.mxu0 0
        %1486 = vmatprep.subr.bf16.mxu0 0
        %1487 = vmatpush1.bf16.msra.mxu0 0
        %1488 = vmatprep.subr.bf16.mxu0 0
        %1489 = vmatpush1.bf16.msra.mxu0 0
        %1490 = vmatprep.subr.bf16.mxu0 0
        %1491 = vmatpush1.bf16.msra.mxu0 0
        %1492 = vmatprep.subr.bf16.mxu0 0
        %1493 = vmatpush1.bf16.msra.mxu0 0
        %1494 = vmatprep.mubr.bf16.mxu0 0
        %1495 = vmatmul.mubr.bf16.gmra.mrb[0].mxu0 %v1457
        %v1496 = vpop.f32.mrb[0].mxu0
        %v1497 = vadd.f32 0.0, %v1496
        %v1498 = vpop.f32.mrb[0].mxu0
        %v1499 = vpop.f32.mrb[0].mxu0
        %v1500 = vpop.f32.mrb[0].mxu0
        %1501 = vdwg.mxu0
        %v1503 = vrot.slane %v1352, 4
        %1504 = vrot.lane.b32.xlu0 %v838, 40
        %v1505 = vpop.permute.xlu0 %1504
        %v1507 = vsel %vm843, %v1503, 0
        %v1510 = vsel %vm1360, %v1505, 0
        %1512 = vmatprep.subr.bf16.mxu0 0
        %1513 = vmatpush1.bf16.msra.mxu0 %v1510
        %1514 = vmatprep.subr.bf16.mxu0 0
        %1515 = vmatpush1.bf16.msra.mxu0 0
        %1516 = vmatprep.subr.bf16.mxu0 0
        %1517 = vmatpush1.bf16.msra.mxu0 0
        %1518 = vmatprep.subr.bf16.mxu0 0
        %1519 = vmatpush1.bf16.msra.mxu0 0
        %1520 = vmatprep.subr.bf16.mxu0 0
        %1521 = vmatpush1.bf16.msra.mxu0 0
        %1522 = vmatprep.subr.bf16.mxu0 0
        %1523 = vmatpush1.bf16.msra.mxu0 0
        %1524 = vmatprep.subr.bf16.mxu0 0
        %1525 = vmatpush1.bf16.msra.mxu0 0
        %1526 = vmatprep.subr.bf16.mxu0 0
        %1527 = vmatpush1.bf16.msra.mxu0 0
        %1528 = vmatprep.subr.bf16.mxu0 0
        %1529 = vmatpush1.bf16.msra.mxu0 0
        %1530 = vmatprep.subr.bf16.mxu0 0
        %1531 = vmatpush1.bf16.msra.mxu0 0
        %1532 = vmatprep.subr.bf16.mxu0 0
        %1533 = vmatpush1.bf16.msra.mxu0 0
        %1534 = vmatprep.subr.bf16.mxu0 0
        %1535 = vmatpush1.bf16.msra.mxu0 0
        %1536 = vmatprep.subr.bf16.mxu0 0
        %1537 = vmatpush1.bf16.msra.mxu0 0
        %1538 = vmatprep.subr.bf16.mxu0 0
        %1539 = vmatpush1.bf16.msra.mxu0 0
        %1540 = vmatprep.subr.bf16.mxu0 0
        %1541 = vmatpush1.bf16.msra.mxu0 0
        %1542 = vmatprep.subr.bf16.mxu0 0
        %1543 = vmatpush1.bf16.msra.mxu0 0
        %1544 = vmatprep.mubr.bf16.mxu0 0
        %1545 = vmatmul.mubr.bf16.gmra.mrb[0].mxu0 %v1507
        %v1546 = vpop.f32.mrb[0].mxu0
        %v1547 = vadd.f32 0.0, %v1546
        %v1548 = vpop.f32.mrb[0].mxu0
        %v1549 = vpop.f32.mrb[0].mxu0
        %v1550 = vpop.f32.mrb[0].mxu0
        %1551 = vdwg.mxu0
        %1553 = vrot.lane.b32.xlu0 %v1449, 8
        %v1554 = vpop.permute.xlu0 %1553
        %1557 = vrot.lane.b32.xlu0 %v1497, 16
        %v1558 = vpop.permute.xlu0 %1557
        %1561 = vrot.lane.b32.xlu0 %v1547, 24
        %v1562 = vpop.permute.xlu0 %1561
        %v1564 = vsel %vm843, %v1399, %v1554
        %vm1565 = vcmask 130048
        %v1566 = vsel %vm1565, %v1564, %v1558
        %vm1567 = vcmask 195584
        %v1568 = vsel %vm1567, %v1566, %v1562
        %1569 = vrot.lane.b32.xlu0 %v1048, 64
        %v1570 = vpop.permute.xlu0 %1569
        %v1572 = vsel %vm843, %v1353, 0
        %v1575 = vsel %vm1360, %v1570, 0
        %1577 = vmatprep.subr.bf16.mxu0 0
        %1578 = vmatpush1.bf16.msra.mxu0 %v1575
        %1579 = vmatprep.subr.bf16.mxu0 0
        %1580 = vmatpush1.bf16.msra.mxu0 0
        %1581 = vmatprep.subr.bf16.mxu0 0
        %1582 = vmatpush1.bf16.msra.mxu0 0
        %1583 = vmatprep.subr.bf16.mxu0 0
        %1584 = vmatpush1.bf16.msra.mxu0 0
        %1585 = vmatprep.subr.bf16.mxu0 0
        %1586 = vmatpush1.bf16.msra.mxu0 0
        %1587 = vmatprep.subr.bf16.mxu0 0
        %1588 = vmatpush1.bf16.msra.mxu0 0
        %1589 = vmatprep.subr.bf16.mxu0 0
        %1590 = vmatpush1.bf16.msra.mxu0 0
        %1591 = vmatprep.subr.bf16.mxu0 0
        %1592 = vmatpush1.bf16.msra.mxu0 0
        %1593 = vmatprep.subr.bf16.mxu0 0
        %1594 = vmatpush1.bf16.msra.mxu0 0
        %1595 = vmatprep.subr.bf16.mxu0 0
        %1596 = vmatpush1.bf16.msra.mxu0 0
        %1597 = vmatprep.subr.bf16.mxu0 0
        %1598 = vmatpush1.bf16.msra.mxu0 0
        %1599 = vmatprep.subr.bf16.mxu0 0
        %1600 = vmatpush1.bf16.msra.mxu0 0
        %1601 = vmatprep.subr.bf16.mxu0 0
        %1602 = vmatpush1.bf16.msra.mxu0 0
        %1603 = vmatprep.subr.bf16.mxu0 0
        %1604 = vmatpush1.bf16.msra.mxu0 0
        %1605 = vmatprep.subr.bf16.mxu0 0
        %1606 = vmatpush1.bf16.msra.mxu0 0
        %1607 = vmatprep.subr.bf16.mxu0 0
        %1608 = vmatpush1.bf16.msra.mxu0 0
        %1609 = vmatprep.mubr.bf16.mxu0 0
        %1610 = vmatmul.mubr.bf16.gmra.mrb[0].mxu0 %v1572
        %v1611 = vpop.f32.mrb[0].mxu0
        %v1612 = vadd.f32 0.0, %v1611
        %v1613 = vpop.f32.mrb[0].mxu0
        %v1614 = vpop.f32.mrb[0].mxu0
        %v1615 = vpop.f32.mrb[0].mxu0
        %1616 = vdwg.mxu0
        %v1618 = vrot.slane %v1353, 4
        %1619 = vrot.lane.b32.xlu0 %v1048, 56
        %v1620 = vpop.permute.xlu0 %1619
        %v1622 = vsel %vm843, %v1618, 0
        %v1625 = vsel %vm1360, %v1620, 0
        %1627 = vmatprep.subr.bf16.mxu0 0
        %1628 = vmatpush1.bf16.msra.mxu0 %v1625
        %1629 = vmatprep.subr.bf16.mxu0 0
        %1630 = vmatpush1.bf16.msra.mxu0 0
        %1631 = vmatprep.subr.bf16.mxu0 0
        %1632 = vmatpush1.bf16.msra.mxu0 0
        %1633 = vmatprep.subr.bf16.mxu0 0
        %1634 = vmatpush1.bf16.msra.mxu0 0
        %1635 = vmatprep.subr.bf16.mxu0 0
        %1636 = vmatpush1.bf16.msra.mxu0 0
        %1637 = vmatprep.subr.bf16.mxu0 0
        %1638 = vmatpush1.bf16.msra.mxu0 0
        %1639 = vmatprep.subr.bf16.mxu0 0
        %1640 = vmatpush1.bf16.msra.mxu0 0
        %1641 = vmatprep.subr.bf16.mxu0 0
        %1642 = vmatpush1.bf16.msra.mxu0 0
        %1643 = vmatprep.subr.bf16.mxu0 0
        %1644 = vmatpush1.bf16.msra.mxu0 0
        %1645 = vmatprep.subr.bf16.mxu0 0
        %1646 = vmatpush1.bf16.msra.mxu0 0
        %1647 = vmatprep.subr.bf16.mxu0 0
        %1648 = vmatpush1.bf16.msra.mxu0 0
        %1649 = vmatprep.subr.bf16.mxu0 0
        %1650 = vmatpush1.bf16.msra.mxu0 0
        %1651 = vmatprep.subr.bf16.mxu0 0
        %1652 = vmatpush1.bf16.msra.mxu0 0
        %1653 = vmatprep.subr.bf16.mxu0 0
        %1654 = vmatpush1.bf16.msra.mxu0 0
        %1655 = vmatprep.subr.bf16.mxu0 0
        %1656 = vmatpush1.bf16.msra.mxu0 0
        %1657 = vmatprep.subr.bf16.mxu0 0
        %1658 = vmatpush1.bf16.msra.mxu0 0
        %1659 = vmatprep.mubr.bf16.mxu0 0
        %1660 = vmatmul.mubr.bf16.gmra.mrb[0].mxu0 %v1622
        %v1661 = vpop.f32.mrb[0].mxu0
        %v1662 = vadd.f32 0.0, %v1661
        %v1663 = vpop.f32.mrb[0].mxu0
        %v1664 = vpop.f32.mrb[0].mxu0
        %v1665 = vpop.f32.mrb[0].mxu0
        %1666 = vdwg.mxu0
        %1667 = vrot.lane.b32.xlu0 %v1048, 48
        %v1668 = vpop.permute.xlu0 %1667
        %v1670 = vsel %vm843, %v1354, 0
        %v1673 = vsel %vm1360, %v1668, 0
        %1675 = vmatprep.subr.bf16.mxu0 0
        %1676 = vmatpush1.bf16.msra.mxu0 %v1673
        %1677 = vmatprep.subr.bf16.mxu0 0
        %1678 = vmatpush1.bf16.msra.mxu0 0
        %1679 = vmatprep.subr.bf16.mxu0 0
        %1680 = vmatpush1.bf16.msra.mxu0 0
        %1681 = vmatprep.subr.bf16.mxu0 0
        %1682 = vmatpush1.bf16.msra.mxu0 0
        %1683 = vmatprep.subr.bf16.mxu0 0
        %1684 = vmatpush1.bf16.msra.mxu0 0
        %1685 = vmatprep.subr.bf16.mxu0 0
        %1686 = vmatpush1.bf16.msra.mxu0 0
        %1687 = vmatprep.subr.bf16.mxu0 0
        %1688 = vmatpush1.bf16.msra.mxu0 0
        %1689 = vmatprep.subr.bf16.mxu0 0
        %1690 = vmatpush1.bf16.msra.mxu0 0
        %1691 = vmatprep.subr.bf16.mxu0 0
        %1692 = vmatpush1.bf16.msra.mxu0 0
        %1693 = vmatprep.subr.bf16.mxu0 0
        %1694 = vmatpush1.bf16.msra.mxu0 0
        %1695 = vmatprep.subr.bf16.mxu0 0
        %1696 = vmatpush1.bf16.msra.mxu0 0
        %1697 = vmatprep.subr.bf16.mxu0 0
        %1698 = vmatpush1.bf16.msra.mxu0 0
        %1699 = vmatprep.subr.bf16.mxu0 0
        %1700 = vmatpush1.bf16.msra.mxu0 0
        %1701 = vmatprep.subr.bf16.mxu0 0
        %1702 = vmatpush1.bf16.msra.mxu0 0
        %1703 = vmatprep.subr.bf16.mxu0 0
        %1704 = vmatpush1.bf16.msra.mxu0 0
        %1705 = vmatprep.subr.bf16.mxu0 0
        %1706 = vmatpush1.bf16.msra.mxu0 0
        %1707 = vmatprep.mubr.bf16.mxu0 0
        %1708 = vmatmul.mubr.bf16.gmra.mrb[0].mxu0 %v1670
        %v1709 = vpop.f32.mrb[0].mxu0
        %v1710 = vadd.f32 0.0, %v1709
        %v1711 = vpop.f32.mrb[0].mxu0
        %v1712 = vpop.f32.mrb[0].mxu0
        %v1713 = vpop.f32.mrb[0].mxu0
        %1714 = vdwg.mxu0
        %v1716 = vrot.slane %v1354, 4
        %1717 = vrot.lane.b32.xlu0 %v1048, 40
        %v1718 = vpop.permute.xlu0 %1717
        %v1720 = vsel %vm843, %v1716, 0
        %v1723 = vsel %vm1360, %v1718, 0
        %1725 = vmatprep.subr.bf16.mxu0 0
        %1726 = vmatpush1.bf16.msra.mxu0 %v1723
        %1727 = vmatprep.subr.bf16.mxu0 0
        %1728 = vmatpush1.bf16.msra.mxu0 0
        %1729 = vmatprep.subr.bf16.mxu0 0
        %1730 = vmatpush1.bf16.msra.mxu0 0
        %1731 = vmatprep.subr.bf16.mxu0 0
        %1732 = vmatpush1.bf16.msra.mxu0 0
        %1733 = vmatprep.subr.bf16.mxu0 0
        %1734 = vmatpush1.bf16.msra.mxu0 0
        %1735 = vmatprep.subr.bf16.mxu0 0
        %1736 = vmatpush1.bf16.msra.mxu0 0
        %1737 = vmatprep.subr.bf16.mxu0 0
        %1738 = vmatpush1.bf16.msra.mxu0 0
        %1739 = vmatprep.subr.bf16.mxu0 0
        %1740 = vmatpush1.bf16.msra.mxu0 0
        %1741 = vmatprep.subr.bf16.mxu0 0
        %1742 = vmatpush1.bf16.msra.mxu0 0
        %1743 = vmatprep.subr.bf16.mxu0 0
        %1744 = vmatpush1.bf16.msra.mxu0 0
        %1745 = vmatprep.subr.bf16.mxu0 0
        %1746 = vmatpush1.bf16.msra.mxu0 0
        %1747 = vmatprep.subr.bf16.mxu0 0
        %1748 = vmatpush1.bf16.msra.mxu0 0
        %1749 = vmatprep.subr.bf16.mxu0 0
        %1750 = vmatpush1.bf16.msra.mxu0 0
        %1751 = vmatprep.subr.bf16.mxu0 0
        %1752 = vmatpush1.bf16.msra.mxu0 0
        %1753 = vmatprep.subr.bf16.mxu0 0
        %1754 = vmatpush1.bf16.msra.mxu0 0
        %1755 = vmatprep.subr.bf16.mxu0 0
        %1756 = vmatpush1.bf16.msra.mxu0 0
        %1757 = vmatprep.mubr.bf16.mxu0 0
        %1758 = vmatmul.mubr.bf16.gmra.mrb[0].mxu0 %v1720
        %v1759 = vpop.f32.mrb[0].mxu0
        %v1760 = vadd.f32 0.0, %v1759
        %v1761 = vpop.f32.mrb[0].mxu0
        %v1762 = vpop.f32.mrb[0].mxu0
        %v1763 = vpop.f32.mrb[0].mxu0
        %1764 = vdwg.mxu0
        %1766 = vrot.lane.b32.xlu0 %v1662, 8
        %v1767 = vpop.permute.xlu0 %1766
        %1770 = vrot.lane.b32.xlu0 %v1710, 16
        %v1771 = vpop.permute.xlu0 %1770
        %1774 = vrot.lane.b32.xlu0 %v1760, 24
        %v1775 = vpop.permute.xlu0 %1774
        %v1777 = vsel %vm843, %v1612, %v1767
        %v1778 = vsel %vm1565, %v1777, %v1771
        %v1779 = vsel %vm1567, %v1778, %v1775
        %v1780 = vpack.c.bf16 %v1779, %v1568
        %v1781 = vld [vmem:[%s729] sm:$0xf]
        %v1782 = vld [vmem:[%s729 + $0x4] sm:$0xf]
        %v1783 = vld [vmem:[%s729 + $0x8] sm:$0xf]
        %v1784 = vld [vmem:[%s729 + $0xc] sm:$0xf]
        %v1785 = vld [vmem:[%s732] sm:$0x1]
        %v1787 = vlaneseq
        %v1788 = vshrl.u32 %v1787, 7
        %v1789 = vsub.s32 0, %v1788
        %v1790 = vrot.slane %v1785, %v1789
        %v1796 = vunpack.c.l.b16 %v1781
        %v1797 = vunpack.c.l.b16 %v1782
        %v1798 = vunpack.c.l.b16 %v1783
        %v1799 = vunpack.c.l.b16 %v1784
        %v1800 = vpack.c.b16 %v1797, %v1796
        %v1801 = vpack.c.b16 %v1799, %v1798
        %v1805 = vsel %vm793, %v1780, 0
        %1807 = vmatprep.subr.bf16.mxu0 0
        %1808 = vmatpush1.bf16.msra.mxu0 %v1800
        %1809 = vmatprep.subr.bf16.mxu0 0
        %1810 = vmatpush1.bf16.msra.mxu0 %v1801
        %1811 = vmatprep.subr.bf16.mxu0 0
        %1812 = vmatpush1.bf16.msra.mxu0 0
        %1813 = vmatprep.subr.bf16.mxu0 0
        %1814 = vmatpush1.bf16.msra.mxu0 0
        %1815 = vmatprep.subr.bf16.mxu0 0
        %1816 = vmatpush1.bf16.msra.mxu0 0
        %1817 = vmatprep.subr.bf16.mxu0 0
        %1818 = vmatpush1.bf16.msra.mxu0 0
        %1819 = vmatprep.subr.bf16.mxu0 0
        %1820 = vmatpush1.bf16.msra.mxu0 0
        %1821 = vmatprep.subr.bf16.mxu0 0
        %1822 = vmatpush1.bf16.msra.mxu0 0
        %1823 = vmatprep.subr.bf16.mxu0 0
        %1824 = vmatpush1.bf16.msra.mxu0 0
        %1825 = vmatprep.subr.bf16.mxu0 0
        %1826 = vmatpush1.bf16.msra.mxu0 0
        %1827 = vmatprep.subr.bf16.mxu0 0
        %1828 = vmatpush1.bf16.msra.mxu0 0
        %1829 = vmatprep.subr.bf16.mxu0 0
        %1830 = vmatpush1.bf16.msra.mxu0 0
        %1831 = vmatprep.subr.bf16.mxu0 0
        %1832 = vmatpush1.bf16.msra.mxu0 0
        %1833 = vmatprep.subr.bf16.mxu0 0
        %1834 = vmatpush1.bf16.msra.mxu0 0
        %1835 = vmatprep.subr.bf16.mxu0 0
        %1836 = vmatpush1.bf16.msra.mxu0 0
        %1837 = vmatprep.subr.bf16.mxu0 0
        %1838 = vmatpush1.bf16.msra.mxu0 0
        %1839 = vmatprep.mubr.bf16.mxu0 0
        %1840 = vmatmul.mubr.bf16.gmra.mrb[0].mxu0 %v1805
        %v1841 = vpop.f32.mrb[0].mxu0
        %v1842 = vadd.f32 %v1790, %v1841
        %v1843 = vpop.f32.mrb[0].mxu0
        %v1844 = vpop.f32.mrb[0].mxu0
        %v1845 = vadd.f32 %v1790, %v1844
        %v1846 = vpop.f32.mrb[0].mxu0
        %1847 = vdwg.mxu0
        %v1848 = vadd.f32 %v767, %v1842
        %v1849 = vadd.f32 %v768, %v1845
        %v1850 = vld [vmem:[%s607] sm:$0x1]
        %v1851 = vld [vmem:[%s615] sm:$0x1]
        %v1852 = vsel %vm793, %v1848, 0.0
        %1853 = vadd.xlane.f32.xlu0 %v1852
        %v1854 = vpop.xlane.xlu0 %1853
        %v1855 = vsel %vm793, %v1849, 0.0
        %1856 = vadd.xlane.f32.xlu0 %v1855
        %v1857 = vpop.xlane.xlu0 %1856
        %v1858 = vrcp.pop 32.0
        %v1859 = vmul.f32 %v1854, %v1858
        %v1860 = vmul.f32 %v1857, %v1858
        %v1861 = vsub.f32 %v1848, %v1859
        %v1862 = vsub.f32 %v1849, %v1860
        %v1863 = vmul.f32 %v1861, %v1861
        %v1864 = vmul.f32 %v1862, %v1862
        %v1865 = vsel %vm793, %v1863, 0.0
        %1866 = vadd.xlane.f32.xlu0 %v1865
        %v1867 = vpop.xlane.xlu0 %1866
        %v1868 = vsel %vm793, %v1864, 0.0
        %1869 = vadd.xlane.f32.xlu0 %v1868
        %v1870 = vpop.xlane.xlu0 %1869
        %v1871 = vmul.f32 %v1867, %v1858
        %v1872 = vmul.f32 %v1870, %v1858
        %v1873 = vadd.f32 %v1871, 1e-05
        %v1874 = vadd.f32 %v1872, 1e-05
        %v1875 = vrsqrt.pop %v1873
        %v1876 = vrsqrt.pop %v1874
        %v1877 = vmul.f32 %v1861, %v1875
        %v1878 = vmul.f32 %v1862, %v1876
        %v1880 = vlaneseq
        %v1881 = vshrl.u32 %v1880, 7
        %v1882 = vsub.s32 0, %v1881
        %v1883 = vrot.slane %v1850, %v1882
        %v1885 = vmul.f32 %v1877, %v1883
        %v1886 = vmul.f32 %v1878, %v1883
        %v1888 = vlaneseq
        %v1889 = vshrl.u32 %v1888, 7
        %v1890 = vsub.s32 0, %v1889
        %v1891 = vrot.slane %v1851, %v1890
        %v1893 = vadd.f32 %v1885, %v1891
        %v1894 = vadd.f32 %v1886, %v1891
        %v1895 = vpack.c.bf16 %v1894, %v1893
        %v1896 = vld [vmem:[%s737] sm:$0xf]
        %v1897 = vld [vmem:[%s737 + $0x4] sm:$0xf]
        %v1898 = vld [vmem:[%s737 + $0x8] sm:$0xf]
        %v1899 = vld [vmem:[%s737 + $0xc] sm:$0xf]
        %v1900 = vld [vmem:[%s623] sm:$0x1]
        %v1902 = vlaneseq
        %v1903 = vshrl.u32 %v1902, 7
        %v1904 = vsub.s32 0, %v1903
        %v1905 = vrot.slane %v1900, %v1904
        %v1911 = vunpack.c.l.b16 %v1896
        %v1912 = vunpack.c.l.b16 %v1897
        %v1913 = vunpack.c.l.b16 %v1898
        %v1914 = vunpack.c.l.b16 %v1899
        %v1915 = vpack.c.b16 %v1912, %v1911
        %v1916 = vpack.c.b16 %v1914, %v1913
        %v1920 = vsel %vm793, %v1895, 0
        %1922 = vmatprep.subr.bf16.mxu0 0
        %1923 = vmatpush1.bf16.msra.mxu0 %v1915
        %1924 = vmatprep.subr.bf16.mxu0 0
        %1925 = vmatpush1.bf16.msra.mxu0 %v1916
        %1926 = vmatprep.subr.bf16.mxu0 0
        %1927 = vmatpush1.bf16.msra.mxu0 0
        %1928 = vmatprep.subr.bf16.mxu0 0
        %1929 = vmatpush1.bf16.msra.mxu0 0
        %1930 = vmatprep.subr.bf16.mxu0 0
        %1931 = vmatpush1.bf16.msra.mxu0 0
        %1932 = vmatprep.subr.bf16.mxu0 0
        %1933 = vmatpush1.bf16.msra.mxu0 0
        %1934 = vmatprep.subr.bf16.mxu0 0
        %1935 = vmatpush1.bf16.msra.mxu0 0
        %1936 = vmatprep.subr.bf16.mxu0 0
        %1937 = vmatpush1.bf16.msra.mxu0 0
        %1938 = vmatprep.subr.bf16.mxu0 0
        %1939 = vmatpush1.bf16.msra.mxu0 0
        %1940 = vmatprep.subr.bf16.mxu0 0
        %1941 = vmatpush1.bf16.msra.mxu0 0
        %1942 = vmatprep.subr.bf16.mxu0 0
        %1943 = vmatpush1.bf16.msra.mxu0 0
        %1944 = vmatprep.subr.bf16.mxu0 0
        %1945 = vmatpush1.bf16.msra.mxu0 0
        %1946 = vmatprep.subr.bf16.mxu0 0
        %1947 = vmatpush1.bf16.msra.mxu0 0
        %1948 = vmatprep.subr.bf16.mxu0 0
        %1949 = vmatpush1.bf16.msra.mxu0 0
        %1950 = vmatprep.subr.bf16.mxu0 0
        %1951 = vmatpush1.bf16.msra.mxu0 0
        %1952 = vmatprep.subr.bf16.mxu0 0
        %1953 = vmatpush1.bf16.msra.mxu0 0
        %1954 = vmatprep.mubr.bf16.mxu0 0
        %1955 = vmatmul.mubr.bf16.gmra.mrb[0].mxu0 %v1920
        %v1956 = vpop.f32.mrb[0].mxu0
        %v1957 = vadd.f32 %v1905, %v1956
        %v1958 = vpop.f32.mrb[0].mxu0
        %v1959 = vpop.f32.mrb[0].mxu0
        %v1960 = vadd.f32 %v1905, %v1959
        %v1961 = vpop.f32.mrb[0].mxu0
        %1962 = vdwg.mxu0
        %v1963 = vmax.f32 %v1957, 0.0
        %v1964 = vmax.f32 %v1960, 0.0
        %v1965 = vpack.c.bf16 %v1964, %v1963
        %v1966 = vld [vmem:[%s742] sm:$0xf]
        %v1967 = vld [vmem:[%s742 + $0x4] sm:$0xf]
        %v1968 = vld [vmem:[%s742 + $0x8] sm:$0xf]
        %v1969 = vld [vmem:[%s742 + $0xc] sm:$0xf]
        %v1970 = vld [vmem:[%s742 + $0x10] sm:$0xf]
        %v1971 = vld [vmem:[%s742 + $0x14] sm:$0xf]
        %v1972 = vld [vmem:[%s742 + $0x18] sm:$0xf]
        %v1973 = vld [vmem:[%s742 + $0x1c] sm:$0xf]
        %v1974 = vld [vmem:[%s745] sm:$0x1]
        %v1976 = vlaneseq
        %v1977 = vshrl.u32 %v1976, 7
        %v1978 = vsub.s32 0, %v1977
        %v1979 = vrot.slane %v1974, %v1978
        %v1989 = vunpack.c.l.b16 %v1966
        %v1990 = vunpack.c.l.b16 %v1967
        %v1991 = vunpack.c.l.b16 %v1968
        %v1992 = vunpack.c.l.b16 %v1969
        %v1993 = vunpack.c.l.b16 %v1970
        %v1994 = vunpack.c.l.b16 %v1971
        %v1995 = vunpack.c.l.b16 %v1972
        %v1996 = vunpack.c.l.b16 %v1973
        %v1997 = vpack.c.b16 %v1990, %v1989
        %v1998 = vpack.c.b16 %v1992, %v1991
        %v1999 = vpack.c.b16 %v1994, %v1993
        %v2000 = vpack.c.b16 %v1996, %v1995
        %vm2005 = vcmask 523264
        %v2007 = vsel %vm2005, %v1965, 0
        %2009 = vmatprep.subr.bf16.mxu0 0
        %2010 = vmatpush1.bf16.msra.mxu0 %v1997
        %2011 = vmatprep.subr.bf16.mxu0 0
        %2012 = vmatpush1.bf16.msra.mxu0 %v1998
        %2013 = vmatprep.subr.bf16.mxu0 0
        %2014 = vmatpush1.bf16.msra.mxu0 %v1999
        %2015 = vmatprep.subr.bf16.mxu0 0
        %2016 = vmatpush1.bf16.msra.mxu0 %v2000
        %2017 = vmatprep.subr.bf16.mxu0 0
        %2018 = vmatpush1.bf16.msra.mxu0 0
        %2019 = vmatprep.subr.bf16.mxu0 0
        %2020 = vmatpush1.bf16.msra.mxu0 0
        %2021 = vmatprep.subr.bf16.mxu0 0
        %2022 = vmatpush1.bf16.msra.mxu0 0
        %2023 = vmatprep.subr.bf16.mxu0 0
        %2024 = vmatpush1.bf16.msra.mxu0 0
        %2025 = vmatprep.subr.bf16.mxu0 0
        %2026 = vmatpush1.bf16.msra.mxu0 0
        %2027 = vmatprep.subr.bf16.mxu0 0
        %2028 = vmatpush1.bf16.msra.mxu0 0
        %2029 = vmatprep.subr.bf16.mxu0 0
        %2030 = vmatpush1.bf16.msra.mxu0 0
        %2031 = vmatprep.subr.bf16.mxu0 0
        %2032 = vmatpush1.bf16.msra.mxu0 0
        %2033 = vmatprep.subr.bf16.mxu0 0
        %2034 = vmatpush1.bf16.msra.mxu0 0
        %2035 = vmatprep.subr.bf16.mxu0 0
        %2036 = vmatpush1.bf16.msra.mxu0 0
        %2037 = vmatprep.subr.bf16.mxu0 0
        %2038 = vmatpush1.bf16.msra.mxu0 0
        %2039 = vmatprep.subr.bf16.mxu0 0
        %2040 = vmatpush1.bf16.msra.mxu0 0
        %2041 = vmatprep.mubr.bf16.mxu0 0
        %2042 = vmatmul.mubr.bf16.gmra.mrb[0].mxu0 %v2007
        %v2043 = vpop.f32.mrb[0].mxu0
        %v2044 = vadd.f32 %v1979, %v2043
        %v2045 = vpop.f32.mrb[0].mxu0
        %v2046 = vpop.f32.mrb[0].mxu0
        %v2047 = vadd.f32 %v1979, %v2046
        %v2048 = vpop.f32.mrb[0].mxu0
        %2049 = vdwg.mxu0
        %v2050 = vadd.f32 %v1893, %v2044
        %v2051 = vadd.f32 %v1894, %v2047
        %v2052 = vld [vmem:[%s748] sm:$0x1]
        %v2053 = vld [vmem:[%s751] sm:$0x1]
        %v2054 = vsel %vm793, %v2050, 0.0
        %2055 = vadd.xlane.f32.xlu0 %v2054
        %v2056 = vpop.xlane.xlu0 %2055
        %v2057 = vsel %vm793, %v2051, 0.0
        %2058 = vadd.xlane.f32.xlu0 %v2057
        %v2059 = vpop.xlane.xlu0 %2058
        %v2060 = vmul.f32 %v2056, %v1858
        %v2061 = vmul.f32 %v2059, %v1858
        %v2062 = vsub.f32 %v2050, %v2060
        %v2063 = vsub.f32 %v2051, %v2061
        %v2064 = vmul.f32 %v2062, %v2062
        %v2065 = vmul.f32 %v2063, %v2063
        %v2066 = vsel %vm793, %v2064, 0.0
        %2067 = vadd.xlane.f32.xlu0 %v2066
        %v2068 = vpop.xlane.xlu0 %2067
        %v2069 = vsel %vm793, %v2065, 0.0
        %2070 = vadd.xlane.f32.xlu0 %v2069
        %v2071 = vpop.xlane.xlu0 %2070
        %v2072 = vmul.f32 %v2068, %v1858
        %v2073 = vmul.f32 %v2071, %v1858
        %v2074 = vadd.f32 %v2072, 1e-05
        %v2075 = vadd.f32 %v2073, 1e-05
        %v2076 = vrsqrt.pop %v2074
        %v2077 = vrsqrt.pop %v2075
        %v2078 = vmul.f32 %v2062, %v2076
        %v2079 = vmul.f32 %v2063, %v2077
        %v2081 = vlaneseq
        %v2082 = vshrl.u32 %v2081, 7
        %v2083 = vsub.s32 0, %v2082
        %v2084 = vrot.slane %v2052, %v2083
        %v2086 = vmul.f32 %v2078, %v2084
        %v2087 = vmul.f32 %v2079, %v2084
        %v2089 = vlaneseq
        %v2090 = vshrl.u32 %v2089, 7
        %v2091 = vsub.s32 0, %v2090
        %v2092 = vrot.slane %v2053, %v2091
        %v2094 = vadd.f32 %v2086, %v2092
        %v2095 = vadd.f32 %v2087, %v2092
        %2096 = vst.msk [vmem:[%s709] sm:$0xff] %vm793, %v2094
        %2097 = vst.msk [vmem:[%s709 + $0x8] sm:$0xff] %vm793, %v2095
        %2098 = vst.msk [vmem:[#allocation2] sm:$0xff] %vm793, %v2094
        %2099 = vst.msk [vmem:[#allocation2 + $0x8] sm:$0xff] %vm793, %v2095
        %s2100 = sand.u32 %s394, 1
        %s2101 = scalar_lea.sflag [#allocation5], %s2100
        %s2102 = sand.u32 %s394, 1
        %s2103 = smul.addr %s2102, 16
        %s2104 = scalar_lea.vmem [#allocation11], %s2103
        %p2105 = scmp.lt.s32.totalorder %s32, 1
        %s2106 = scalar_select %p2105, %s32, 1
        %s2107 = smul.addr %s2106, 8
        %s2108 = smul.addr %s2107, 8
        %s2109 = scalar_lea.vmem %s15, %s2108
        // Predicated region
        $region101: #{tpu_custom_call.1} parent=75 // pred_check
          %p2110 = pneg %p404
        $region102: #{tpu_custom_call.1} parent=75 // pred_check_branch
          %2112 = sbr.rel (%p2110) target = $region104
        $region103: #{tpu_custom_call.1} parent=75 // pred_region
          %s2114 = ssub.s32 256, 256
          %2115 = vsyncadd %s2101, %s2114
          %s2116 = smul.addr %s32, 2
          %s2117 = smul.addr %s2116, 128
          %s2118 = scalar_lea.hbm %s14, %s2117
          %s2119 = sshll.u32 %s2104, 4
          %s2120 = int_to_ptr.vmem [resolvable:$true] %s2119
          %2125 = dma.vmem_to_hbm [thread:$0]  %s2120, 256, %s2118, %s2101, 128, 128, 8
        $region104: #{tpu_custom_call.1} parent=75 // pred_fallthru
          _
        // Predicated region
        $region105: #{tpu_custom_call.1} parent=75 // pred_check
          %p2126 = pneg %p430
        $region106: #{tpu_custom_call.1} parent=75 // pred_check_branch
          %2128 = sbr.rel (%p2126) target = $region108
        $region107: #{tpu_custom_call.1} parent=75 // pred_region
          _
        $region108: #{tpu_custom_call.1} parent=75 // pred_fallthru
          _
      $region76: #{tpu_custom_call.1} parent=5 // pred_fallthru
        _
      %p2129 = scmp.le.s32.totalorder 2, %s27
      // Predicated region
      $region109: #{tpu_custom_call.1} parent=5 // pred_check
        %p2130 = pneg %p2129
      $region110: #{tpu_custom_call.1} parent=5 // pred_check_branch
        %2132 = sbr.rel (%p2130) target = $region112
      $region111: #{tpu_custom_call.1} parent=5 // pred_region
        %s2133 = ssub.s32 %s27, 2
        // Predicated region
        $region113: #{tpu_custom_call.1} parent=111 // pred_check
          %p2134 = pneg %p410
        $region114: #{tpu_custom_call.1} parent=111 // pred_check_branch
          %2136 = sbr.rel (%p2134) target = $region116
        $region115: #{tpu_custom_call.1} parent=111 // pred_region
          %s2137 = sand.u32 %s395, 1
          %s2138 = scalar_lea.sflag [#allocation5], %s2137
          %s2139 = sand.u32 %s395, 1
          %s2140 = smul.addr %s2139, 16
          %s2141 = scalar_lea.vmem [#allocation11], %s2140
          %2142 = dma.done %s2138, 256
        $region116: #{tpu_custom_call.1} parent=111 // pred_fallthru
          _
        // Predicated region
        $region117: #{tpu_custom_call.1} parent=111 // pred_check
          %p2143 = pneg %p436
        $region118: #{tpu_custom_call.1} parent=111 // pred_check_branch
          %2145 = sbr.rel (%p2143) target = $region120
        $region119: #{tpu_custom_call.1} parent=111 // pred_region
          %p2146 = scmp.lt.s32.totalorder %s33, 1
          %s2147 = scalar_select %p2146, %s33, 1
          %s2148 = smul.addr %s2147, 8
          %s2149 = smul.addr %s2148, 8
          %s2150 = scalar_lea.vmem %s15, %s2149
        $region120: #{tpu_custom_call.1} parent=111 // pred_fallthru
          _
      $region112: #{tpu_custom_call.1} parent=5 // pred_fallthru
        _
    $region6: #{tpu_custom_call.1} parent=1 // loop_footer
      %s31 = sadd.s32 1, %s27
    $region7: #{tpu_custom_call.1} parent=1 // loop_footer_branch
      %26 = sbr.rel target = $region3
    $region8: #{tpu_custom_call.1} parent=1 // loop_exit
      _
    %2151 = vsyncpa [#allocation4], 1
    %s2152 = scalar_lea.sflag [#allocation4], 1
    %2153 = vsyncpa %s2152, 1
    %2154 = vsyncpa [#allocation7], 1
    %2155 = vsyncpa [#allocation5], 1
    %s2156 = scalar_lea.sflag [#allocation5], 1
    %2157 = vsyncpa %s2156, 1

</llo_original>
